<compile_context>
chip_gen: v6e
topology: v6e:2x2x1
jax: 0.10.0
libtpu: 0.0.40
codegen_flags: <defaults>
</compile_context>

<pallas_src>
import functools
import math

import numpy as np
import jax
import jax.numpy as jnp
from jax.experimental import pallas as pl
from jax.experimental.pallas import tpu as pltpu


# ------------------------------ slab layout ---------------------------------

def _cffa_layout(cin, cout):
    """Static lane offsets of each parameter matrix inside the (cout, P) slab."""
    sizes = (("wt1", 3 * cin),    # (3,1) conv, taps dh=-1,0,+1 (BN folded)
             ("wt2", 3 * cout),   # (1,3) conv, taps dw=-1,0,+1 (BN folded)
             ("w7", 49),          # grouped 7x7: 49 taps per output channel
             ("w11", cout),       # wide 1x1 (BN folded)
             ("wo", 2 * cout),    # merge 1x1 over cat([thin, wide]) (BN folded)
             ("bias", 5))         # b1, b2, bw1, bw2, bo as 5 columns
    offs, o = {}, 0
    for name, width in sizes:
        offs[name] = (o, width)
        o += width
    return offs, o


_SLAB_ORDER = ("wt1", "wt2", "w7", "w11", "wo", "bias")


# ------------------------------ fused kernel --------------------------------

def _down_kernel(x_ref, mask_ref, p1_ref, p2_ref, out_ref, *, hdim, wdim,
                 cin, cout):
    """(pooled x) -> CFFA -> Dropout(id) -> CFFA -> Dropout(id), (C, M) layout.

    x_ref   : (Cin, M)    max-pooled activations, M = N*hdim*wdim on lanes
    mask_ref: (14, M)     rows 0..6 = h-boundary masks (dh=-3..3),
                          rows 7..13 = w-boundary masks (dw=-3..3)
    p1_ref  : (Cout, 128) packed CFFA1 params (BN folded), see _cffa_layout
    p2_ref  : (Cout, 128) packed CFFA2 params
    out_ref : (Cout, M)
    """
    f32 = jnp.float32
    m = out_ref.shape[1]
    masks = mask_ref[...]

    def hmask(dh):                      # 1.0 where 0 <= h+dh < hdim
        r = dh + 3
        return masks[r:r + 1, :]

    def wmask(dw):                      # 1.0 where 0 <= w+dw < wdim
        r = dw + 10
        return masks[r:r + 1, :]

    def roll_lanes(v, off):
        # roll_lanes(v, off)[c, L] = v[c, (L + off) % m].  Wrapped lanes are
        # always zeroed afterwards by the h/w boundary masks (keep them!).
        s = (-off) % m
        return v if s == 0 else pltpu.roll(v, s, axis=1)

    def tree_sum(vals):
        while len(vals) > 1:
            nxt = [vals[k] + vals[k + 1] for k in range(0, len(vals) - 1, 2)]
            if len(vals) % 2:
                nxt.append(vals[-1])
            vals = nxt
        return vals[0]

    def cffa(x, prm_ref, cin_l, cout_l):
        offs, _ = _cffa_layout(cin_l, cout_l)
        P = prm_ref[...]                               # (cout_l, 128): 1 vreg

        def W(name):
            o, width = offs[name]
            return P[:, o:o + width]

        ob = offs["bias"][0]
        b1, b2, bw1, bw2, bo = (P[:, ob + i:ob + i + 1] for i in range(5))

        # --- thin: (3,1) conv (+folded BN) + ReLU as ONE (cout, 3*cin) dot
        # over sublane-stacked taps (cheap concat beats 3 tiny MXU dots).
        stk = jnp.concatenate(
            [roll_lanes(x, -wdim) * hmask(-1), x,
             roll_lanes(x, wdim) * hmask(1)], axis=0)
        t = jnp.maximum(
            b1 + jnp.dot(W("wt1"), stk, preferred_element_type=f32), 0.0)

        # --- thin: (1,3) conv (+folded BN) + ReLU, same single-dot trick.
        stk = jnp.concatenate(
            [roll_lanes(t, -1) * wmask(-1), t,
             roll_lanes(t, 1) * wmask(1)], axis=0)
        thin = jnp.maximum(
            b2 + jnp.dot(W("wt2"), stk, preferred_element_type=f32), 0.0)

        # --- wide: grouped 7x7 stays OFF the MXU (49-tap VPU MAC with
        # channels on sublanes).  Group gather is a sublane replicate
        # (identity when cin == cout), not an MXU matmul.
        # TODO(synk): generalize the grouped 7x7 to cin/groups > 1 (only
        # needed for WideConv with in_channels > out_channels).
        if cin_l == cout_l:
            xg = x
        else:
            rep = cout_l // cin_l                      # = cout_g, groups = cin
            xg = jnp.concatenate(
                [x[c:c + 1] for c in range(cin_l) for _ in range(rep)], axis=0)

        # Column-shifted + w-masked copies, computed once per dw (XLU rolls).
        xs = []
        for j in range(7):
            dw = j - 3
            v = roll_lanes(xg, dw)
            if dw != 0:
                v = v * wmask(dw)
            xs.append(v)

        # 7 independent row accumulators (ILP for the 4-wide VALU) + tree-sum;
        # the h-mask is factored out of the inner loop.
        w7 = W("w7")
        rows = []
        for i in range(7):
            dh = i - 3
            racc = None
            for j in range(7):
                tap = w7[:, i * 7 + j:i * 7 + j + 1]
                v = xs[j] if dh == 0 else roll_lanes(xs[j], dh * wdim)
                term = tap * v
                racc = term if racc is None else racc + term
            if dh != 0:
                racc = racc * hmask(dh)
            rows.append(racc)
        wact = jnp.maximum(bw1 + tree_sum(rows), 0.0)

        # --- wide: 1x1 conv (+folded BN) + ReLU.
        wide = jnp.maximum(
            bw2 + jnp.dot(W("w11"), wact, preferred_element_type=f32), 0.0)

        # --- merge 1x1 over cat([thin, wide]) as ONE K=2*cout dot (the
        # (16, M) sublane concat is 1-2 vregs and essentially free).
        cat = jnp.concatenate([thin, wide], axis=0)
        return jnp.maximum(
            bo + jnp.dot(W("wo"), cat, preferred_element_type=f32), 0.0)

    y = cffa(x_ref[...], p1_ref, cin, cout)   # CFFA(in_channels, out_channels)
    # nn.Dropout(p): identity in eval mode.
    y = cffa(y, p2_ref, cout, cout)           # CFFA(out_channels, out_channels)
    # nn.Dropout(p): identity in eval mode.
    out_ref[...] = y


# --------------------------------- wrapper ----------------------------------

def _boundary_masks(n, hdim, wdim):
    """(14, M) f32 host-side constants: factored h/w boundary masks."""
    m = n * hdim * wdim
    lane = np.arange(m)
    hh = (lane // wdim) % hdim
    ww = lane % wdim
    rows = [((hh + dh >= 0) & (hh + dh < hdim)) for dh in range(-3, 4)]
    rows += [((ww + dw >= 0) & (ww + dw < wdim)) for dw in range(-3, 4)]
    return np.stack(rows).astype(np.float32)


def down_pallas(params, x_nchw):
    """Eval-mode forward of Down as one fused Pallas TPU kernel (NCHW in/out)."""
    p1, p2 = params["p1"], params["p2"]
    n, cin, h, w = x_nchw.shape
    ho, wo = h // 2, w // 2
    m = n * ho * wo
    cout = p2.shape[0]

    # nn.MaxPool2d(2) folded into the lane-dense re-layout (layout plumbing;
    # XLA fuses the window max with the transpose it already performs).
    xp = x_nchw.reshape(n, cin, ho, 2, wo, 2).max(axis=(3, 5))
    x2d = jnp.transpose(xp, (1, 0, 2, 3)).reshape(cin, m)

    masks = jnp.asarray(_boundary_masks(n, ho, wo))     # jit-time constant

    def full_spec(shape):
        return pl.BlockSpec(shape, lambda i, _nd=len(shape): (0,) * _nd)

    # Single-step grid: the whole problem (a few activation vregs + one
    # (8, 128) param slab per CFFA + the mask slab) lives in VMEM.
    # At realistic N/H/W: tile the BATCH axis (no shift2d halo) and mark it
    # "parallel" (v7x: 2 TensorCores, only 64 MiB VMEM -> ~half the per-tile
    # budget of v6e).  At realistic channel counts (K >= 128) cast the matmul
    # operands to bf16 on v6e/v7x (keep f32 accumulate); keep the depthwise /
    # epilogue path f32 on v5e.
    out2d = pl.pallas_call(
        functools.partial(_down_kernel, hdim=ho, wdim=wo, cin=cin, cout=cout),
        out_shape=jax.ShapeDtypeStruct((cout, m), jnp.float32),
        grid=(1,),
        in_specs=[full_spec(x2d.shape), full_spec(masks.shape),
                  full_spec(p1.shape), full_spec(p2.shape)],
        out_specs=pl.BlockSpec((cout, m), lambda i: (0, 0)),
        compiler_params=pltpu.CompilerParams(
            dimension_semantics=("arbitrary",)),
    )(x2d, masks, p1, p2)

    # (Cout, N*Ho*Wo) -> NCHW.  If Down feeds another fused module, keep the
    # lane-dense (C, M) layout across the module boundary instead.
    return jnp.transpose(out2d.reshape(cout, n, ho, wo), (1, 0, 2, 3))


# --------------------------- parameter construction --------------------------

def _init_conv(key, cout, cin_g, kh, kw):
    fan_in = cin_g * kh * kw
    bound = 1.0 / math.sqrt(fan_in)
    return jax.random.uniform(key, (cout, cin_g, kh, kw), jnp.float32,
                              minval=-bound, maxval=bound)


def _init_bn(key, c):
    k1, k2, k3, k4 = jax.random.split(key, 4)
    return dict(
        gamma=1.0 + 0.1 * jax.random.normal(k1, (c,), jnp.float32),
        beta=0.1 * jax.random.normal(k2, (c,), jnp.float32),
        mean=0.1 * jax.random.normal(k3, (c,), jnp.float32),
        var=jnp.abs(jax.random.normal(k4, (c,), jnp.float32)) + 0.5)


def init_cffa_raw(key, cin, cout):
    ks = jax.random.split(key, 10)
    groups = cout if cin > cout else cin      # WideConv: groups = min(cin, cout)
    return dict(
        cin=cin, cout=cout, groups=groups,
        thin_w1=_init_conv(ks[0], cout, cin, 3, 1), thin_bn1=_init_bn(ks[1], cout),
        thin_w2=_init_conv(ks[2], cout, cout, 1, 3), thin_bn2=_init_bn(ks[3], cout),
        wide_w1=_init_conv(ks[4], cout, cin // groups, 7, 7),
        wide_bn1=_init_bn(ks[5], cout),
        wide_w2=_init_conv(ks[6], cout, cout, 1, 1), wide_bn2=_init_bn(ks[7], cout),
        out_w=_init_conv(ks[8], cout, 2 * cout, 1, 1), out_bn=_init_bn(ks[9], cout))


def init_down_raw(key, cin, cout, p_drop):
    k1, k2 = jax.random.split(key)
    return dict(p=p_drop,
                cffa1=init_cffa_raw(k1, cin, cout),
                cffa2=init_cffa_raw(k2, cout, cout))


def _fold_bn(bn, eps=1e-5):
    scale = bn["gamma"] * jax.lax.rsqrt(bn["var"] + eps)
    shift = bn["beta"] - bn["mean"] * scale
    return scale, shift


def pack_cffa(p):
    """Fold eval-mode BN into the conv weights and pack everything into ONE
    lane-padded (cout, 128) slab (a single DMA tile instead of 12 tiny refs)."""
    cin, cout, groups = p["cin"], p["cout"], p["groups"]
    # One input channel per group (true whenever in_channels <= out_channels).
    assert cin // groups == 1, "grouped 7x7 with cin/groups > 1 not implemented"
    assert cout % cin == 0

    s1, b1 = _fold_bn(p["thin_bn1"])
    s2, b2 = _fold_bn(p["thin_bn2"])
    sw1, bw1 = _fold_bn(p["wide_bn1"])
    sw2, bw2 = _fold_bn(p["wide_bn2"])
    so, bo = _fold_bn(p["out_bn"])

    # (3,1) conv: taps dh=-1,0,+1 concatenated along K -> (cout, 3*cin).
    wt1 = jnp.concatenate([p["thin_w1"][:, :, ki, 0] for ki in range(3)],
                          axis=1) * s1[:, None]
    # (1,3) conv: taps dw=-1,0,+1 concatenated along K -> (cout, 3*cout).
    wt2 = jnp.concatenate([p["thin_w2"][:, :, 0, kj] for kj in range(3)],
                          axis=1) * s2[:, None]
    # grouped 7x7: one 49-tap row per output channel (never expanded dense).
    w7 = p["wide_w1"].reshape(cout, 49) * sw1[:, None]
    w11 = p["wide_w2"][:, :, 0, 0] * sw2[:, None]
    wo = p["out_w"][:, :, 0, 0] * so[:, None]
    bcols = jnp.stack([b1, b2, bw1, bw2, bo], axis=1)          # (cout, 5)

    pieces = dict(wt1=wt1, wt2=wt2, w7=w7, w11=w11, wo=wo, bias=bcols)
    _, width = _cffa_layout(cin, cout)
    slab = jnp.concatenate([pieces[name] for name in _SLAB_ORDER],
                           axis=1).astype(jnp.float32)
    assert slab.shape == (cout, width)
    padded = ((width + 127) // 128) * 128
    return jnp.pad(slab, ((0, 0), (0, padded - width)))


def pack_down(raw):
    return dict(p1=pack_cffa(raw["cffa1"]), p2=pack_cffa(raw["cffa2"]))


# ---------------------- pure-JAX reference (lax.conv) -----------------------

def _conv_ref(x, w, padding, groups=1):
    return jax.lax.conv_general_dilated(
        x, w, window_strides=(1, 1), padding=padding,
        dimension_numbers=("NCHW", "OIHW", "NCHW"),
        feature_group_count=groups, precision=jax.lax.Precision.HIGHEST)


def _bn_ref(x, bn, eps=1e-5):
    scale, shift = _fold_bn(bn, eps)
    return x * scale[None, :, None, None] + shift[None, :, None, None]


def cffa_ref(p, x):
    t = jax.nn.relu(_bn_ref(_conv_ref(x, p["thin_w1"], [(1, 1), (0, 0)]),
                            p["thin_bn1"]))
    t = jax.nn.relu(_bn_ref(_conv_ref(t, p["thin_w2"], [(0, 0), (1, 1)]),
                            p["thin_bn2"]))
    w = jax.nn.relu(_bn_ref(_conv_ref(x, p["wide_w1"], [(3, 3), (3, 3)],
                                      groups=p["groups"]), p["wide_bn1"]))
    w = jax.nn.relu(_bn_ref(_conv_ref(w, p["wide_w2"], [(0, 0), (0, 0)]),
                            p["wide_bn2"]))
    cat = jnp.concatenate([t, w], axis=1)
    return jax.nn.relu(_bn_ref(_conv_ref(cat, p["out_w"], [(0, 0), (0, 0)]),
                               p["out_bn"]))


def down_ref(raw, x):
    n, c, h, w = x.shape
    x = x.reshape(n, c, h // 2, 2, w // 2, 2).max(axis=(3, 5))   # MaxPool2d(2)
    x = cffa_ref(raw["cffa1"], x)   # Dropout: identity in eval mode
    x = cffa_ref(raw["cffa2"], x)   # Dropout: identity in eval mode
    return x


# ----------------------------------- main ------------------------------------

if __name__ == "__main__":
    key = jax.random.PRNGKey(0)
    kx, kp = jax.random.split(key)

    in_channels, out_channels, p_drop = 4, 8, 0.1
    x = jax.random.normal(kx, (2, in_channels, 16, 16), dtype=jnp.float32)  # NCHW

    raw = init_down_raw(kp, in_channels, out_channels, p_drop)
    packed = pack_down(raw)

    fwd = jax.jit(down_pallas)
    out = jax.block_until_ready(fwd(packed, x))

    assert out.shape == (2, out_channels, 8, 8), out.shape
    assert bool(jnp.all(jnp.isfinite(out)))

    # Cross-check the fused kernel against an independent lax.conv reference
    # of the same module with the same parameters (tight all-f32 tolerance).
    ref = jax.block_until_ready(jax.jit(functools.partial(down_ref, raw))(x))
    max_err = float(jnp.max(jnp.abs(out - ref)))
    assert max_err < 1e-3, f"mismatch vs reference: {max_err}"

    print("KERNEL_OK")
</pallas_src>

<mosaic_0001>
module attributes {stable_mosaic.version = 11 : i64} {
  func.func @_down_kernel(%arg0: i32, %arg1: memref<4x128xf32, #tpu.memory_space<vmem>>, %arg2: memref<14x128xf32, #tpu.memory_space<vmem>>, %arg3: memref<8x128xf32, #tpu.memory_space<vmem>>, %arg4: memref<8x128xf32, #tpu.memory_space<vmem>>, %arg5: memref<8x128xf32, #tpu.memory_space<vmem>>) attributes {dimension_semantics = [#tpu.dimension_semantics<arbitrary>], iteration_bounds = array<i64: 1>, scalar_prefetch = 0 : i64, scratch_operands = 0 : i64, tpu.core_type = #tpu.core_type<tc>, window_params = [{pipeline_mode = #tpu.pipeline_mode<synchronous>, transform_indices = @transform_0, window_bounds = array<i64: 4, 128>}, {pipeline_mode = #tpu.pipeline_mode<synchronous>, transform_indices = @transform_1, window_bounds = array<i64: 14, 128>}, {pipeline_mode = #tpu.pipeline_mode<synchronous>, transform_indices = @transform_2, window_bounds = array<i64: 8, 128>}, {pipeline_mode = #tpu.pipeline_mode<synchronous>, transform_indices = @transform_3, window_bounds = array<i64: 8, 128>}, {pipeline_mode = #tpu.pipeline_mode<synchronous>, transform_indices = @transform_4, window_bounds = array<i64: 8, 128>}]} {
    %c0 = arith.constant 0 : index
    %c0_0 = arith.constant 0 : index
    %0 = vector.load %arg2[%c0, %c0_0] : memref<14x128xf32, #tpu.memory_space<vmem>>, vector<14x128xf32>
    %c0_1 = arith.constant 0 : index
    %c0_2 = arith.constant 0 : index
    %1 = vector.load %arg1[%c0_1, %c0_2] : memref<4x128xf32, #tpu.memory_space<vmem>>, vector<4x128xf32>
    %c0_3 = arith.constant 0 : index
    %c0_4 = arith.constant 0 : index
    %2 = vector.load %arg3[%c0_3, %c0_4] : memref<8x128xf32, #tpu.memory_space<vmem>>, vector<8x128xf32>
    %3 = vector.extract_strided_slice %2 {offsets = [0, 109], sizes = [8, 1], strides = [1, 1]} : vector<8x128xf32> to vector<8x1xf32>
    %4 = vector.extract_strided_slice %2 {offsets = [0, 110], sizes = [8, 1], strides = [1, 1]} : vector<8x128xf32> to vector<8x1xf32>
    %5 = vector.extract_strided_slice %2 {offsets = [0, 111], sizes = [8, 1], strides = [1, 1]} : vector<8x128xf32> to vector<8x1xf32>
    %6 = vector.extract_strided_slice %2 {offsets = [0, 112], sizes = [8, 1], strides = [1, 1]} : vector<8x128xf32> to vector<8x1xf32>
    %7 = vector.extract_strided_slice %2 {offsets = [0, 113], sizes = [8, 1], strides = [1, 1]} : vector<8x128xf32> to vector<8x1xf32>
    %c8_i32 = arith.constant 8 : i32
    %8 = tpu.dynamic_rotate %1 by %c8_i32 dim 1 : vector<4x128xf32>, i32 -> vector<4x128xf32>
    %9 = vector.extract_strided_slice %0 {offsets = [2, 0], sizes = [1, 128], strides = [1, 1]} : vector<14x128xf32> to vector<1x128xf32>
    %10 = vector.broadcast %9 : vector<1x128xf32> to vector<4x128xf32>
    %11 = arith.mulf %8, %10 : vector<4x128xf32>
    %c120_i32 = arith.constant 120 : i32
    %12 = tpu.dynamic_rotate %1 by %c120_i32 dim 1 : vector<4x128xf32>, i32 -> vector<4x128xf32>
    %13 = vector.extract_strided_slice %0 {offsets = [4, 0], sizes = [1, 128], strides = [1, 1]} : vector<14x128xf32> to vector<1x128xf32>
    %14 = vector.broadcast %13 : vector<1x128xf32> to vector<4x128xf32>
    %15 = arith.mulf %12, %14 : vector<4x128xf32>
    %16 = tpu.concatenate %11, %1, %15 in 0 : vector<4x128xf32>, vector<4x128xf32>, vector<4x128xf32> -> vector<12x128xf32>
    %17 = vector.extract_strided_slice %2 {offsets = [0, 0], sizes = [8, 12], strides = [1, 1]} : vector<8x128xf32> to vector<8x12xf32>
    %cst = arith.constant dense<0.000000e+00> : vector<8x128xf32>
    %18 = tpu.matmul %17, %16, %cst {dimension_numbers = #tpu.dot_dimension_numbers<[1], [0], [0], [1], [0, 0, 1, 1], [], []>} : vector<8x12xf32>, vector<12x128xf32>, vector<8x128xf32> -> vector<8x128xf32>
    %19 = vector.broadcast %3 : vector<8x1xf32> to vector<8x128xf32>
    %20 = arith.addf %19, %18 : vector<8x128xf32>
    %cst_5 = arith.constant 0.000000e+00 : f32
    %21 = vector.broadcast %cst_5 : f32 to vector<8x128xf32>
    %22 = arith.maximumf %20, %21 : vector<8x128xf32>
    %c1_i32 = arith.constant 1 : i32
    %23 = tpu.dynamic_rotate %22 by %c1_i32 dim 1 : vector<8x128xf32>, i32 -> vector<8x128xf32>
    %24 = vector.extract_strided_slice %0 {offsets = [9, 0], sizes = [1, 128], strides = [1, 1]} : vector<14x128xf32> to vector<1x128xf32>
    %25 = vector.broadcast %24 : vector<1x128xf32> to vector<8x128xf32>
    %26 = arith.mulf %23, %25 : vector<8x128xf32>
    %c127_i32 = arith.constant 127 : i32
    %27 = tpu.dynamic_rotate %22 by %c127_i32 dim 1 : vector<8x128xf32>, i32 -> vector<8x128xf32>
    %28 = vector.extract_strided_slice %0 {offsets = [11, 0], sizes = [1, 128], strides = [1, 1]} : vector<14x128xf32> to vector<1x128xf32>
    %29 = vector.broadcast %28 : vector<1x128xf32> to vector<8x128xf32>
    %30 = arith.mulf %27, %29 : vector<8x128xf32>
    %31 = tpu.concatenate %26, %22, %30 in 0 : vector<8x128xf32>, vector<8x128xf32>, vector<8x128xf32> -> vector<24x128xf32>
    %32 = vector.extract_strided_slice %2 {offsets = [0, 12], sizes = [8, 24], strides = [1, 1]} : vector<8x128xf32> to vector<8x24xf32>
    %cst_6 = arith.constant dense<0.000000e+00> : vector<8x128xf32>
    %33 = tpu.matmul %32, %31, %cst_6 {dimension_numbers = #tpu.dot_dimension_numbers<[1], [0], [0], [1], [0, 0, 1, 1], [], []>} : vector<8x24xf32>, vector<24x128xf32>, vector<8x128xf32> -> vector<8x128xf32>
    %34 = vector.broadcast %4 : vector<8x1xf32> to vector<8x128xf32>
    %35 = arith.addf %34, %33 : vector<8x128xf32>
    %cst_7 = arith.constant 0.000000e+00 : f32
    %36 = vector.broadcast %cst_7 : f32 to vector<8x128xf32>
    %37 = arith.maximumf %35, %36 : vector<8x128xf32>
    %38 = vector.extract_strided_slice %1 {offsets = [0, 0], sizes = [1, 128], strides = [1, 1]} : vector<4x128xf32> to vector<1x128xf32>
    %39 = vector.extract_strided_slice %1 {offsets = [0, 0], sizes = [1, 128], strides = [1, 1]} : vector<4x128xf32> to vector<1x128xf32>
    %40 = vector.extract_strided_slice %1 {offsets = [1, 0], sizes = [1, 128], strides = [1, 1]} : vector<4x128xf32> to vector<1x128xf32>
    %41 = vector.extract_strided_slice %1 {offsets = [1, 0], sizes = [1, 128], strides = [1, 1]} : vector<4x128xf32> to vector<1x128xf32>
    %42 = vector.extract_strided_slice %1 {offsets = [2, 0], sizes = [1, 128], strides = [1, 1]} : vector<4x128xf32> to vector<1x128xf32>
    %43 = vector.extract_strided_slice %1 {offsets = [2, 0], sizes = [1, 128], strides = [1, 1]} : vector<4x128xf32> to vector<1x128xf32>
    %44 = vector.extract_strided_slice %1 {offsets = [3, 0], sizes = [1, 128], strides = [1, 1]} : vector<4x128xf32> to vector<1x128xf32>
    %45 = vector.extract_strided_slice %1 {offsets = [3, 0], sizes = [1, 128], strides = [1, 1]} : vector<4x128xf32> to vector<1x128xf32>
    %46 = tpu.concatenate %38, %39, %40, %41, %42, %43, %44, %45 in 0 : vector<1x128xf32>, vector<1x128xf32>, vector<1x128xf32>, vector<1x128xf32>, vector<1x128xf32>, vector<1x128xf32>, vector<1x128xf32>, vector<1x128xf32> -> vector<8x128xf32>
    %c3_i32 = arith.constant 3 : i32
    %47 = tpu.dynamic_rotate %46 by %c3_i32 dim 1 : vector<8x128xf32>, i32 -> vector<8x128xf32>
    %48 = vector.extract_strided_slice %0 {offsets = [7, 0], sizes = [1, 128], strides = [1, 1]} : vector<14x128xf32> to vector<1x128xf32>
    %49 = vector.broadcast %48 : vector<1x128xf32> to vector<8x128xf32>
    %50 = arith.mulf %47, %49 : vector<8x128xf32>
    %c2_i32 = arith.constant 2 : i32
    %51 = tpu.dynamic_rotate %46 by %c2_i32 dim 1 : vector<8x128xf32>, i32 -> vector<8x128xf32>
    %52 = vector.extract_strided_slice %0 {offsets = [8, 0], sizes = [1, 128], strides = [1, 1]} : vector<14x128xf32> to vector<1x128xf32>
    %53 = vector.broadcast %52 : vector<1x128xf32> to vector<8x128xf32>
    %54 = arith.mulf %51, %53 : vector<8x128xf32>
    %c1_i32_8 = arith.constant 1 : i32
    %55 = tpu.dynamic_rotate %46 by %c1_i32_8 dim 1 : vector<8x128xf32>, i32 -> vector<8x128xf32>
    %56 = vector.extract_strided_slice %0 {offsets = [9, 0], sizes = [1, 128], strides = [1, 1]} : vector<14x128xf32> to vector<1x128xf32>
    %57 = vector.broadcast %56 : vector<1x128xf32> to vector<8x128xf32>
    %58 = arith.mulf %55, %57 : vector<8x128xf32>
    %c127_i32_9 = arith.constant 127 : i32
    %59 = tpu.dynamic_rotate %46 by %c127_i32_9 dim 1 : vector<8x128xf32>, i32 -> vector<8x128xf32>
    %60 = vector.extract_strided_slice %0 {offsets = [11, 0], sizes = [1, 128], strides = [1, 1]} : vector<14x128xf32> to vector<1x128xf32>
    %61 = vector.broadcast %60 : vector<1x128xf32> to vector<8x128xf32>
    %62 = arith.mulf %59, %61 : vector<8x128xf32>
    %c126_i32 = arith.constant 126 : i32
    %63 = tpu.dynamic_rotate %46 by %c126_i32 dim 1 : vector<8x128xf32>, i32 -> vector<8x128xf32>
    %64 = vector.extract_strided_slice %0 {offsets = [12, 0], sizes = [1, 128], strides = [1, 1]} : vector<14x128xf32> to vector<1x128xf32>
    %65 = vector.broadcast %64 : vector<1x128xf32> to vector<8x128xf32>
    %66 = arith.mulf %63, %65 : vector<8x128xf32>
    %c125_i32 = arith.constant 125 : i32
    %67 = tpu.dynamic_rotate %46 by %c125_i32 dim 1 : vector<8x128xf32>, i32 -> vector<8x128xf32>
    %68 = vector.extract_strided_slice %0 {offsets = [13, 0], sizes = [1, 128], strides = [1, 1]} : vector<14x128xf32> to vector<1x128xf32>
    %69 = vector.broadcast %68 : vector<1x128xf32> to vector<8x128xf32>
    %70 = arith.mulf %67, %69 : vector<8x128xf32>
    %71 = vector.extract_strided_slice %2 {offsets = [0, 36], sizes = [8, 49], strides = [1, 1]} : vector<8x128xf32> to vector<8x49xf32>
    %72 = vector.extract_strided_slice %71 {offsets = [0, 0], sizes = [8, 1], strides = [1, 1]} : vector<8x49xf32> to vector<8x1xf32>
    %c24_i32 = arith.constant 24 : i32
    %73 = tpu.dynamic_rotate %50 by %c24_i32 dim 1 : vector<8x128xf32>, i32 -> vector<8x128xf32>
    %74 = vector.broadcast %72 : vector<8x1xf32> to vector<8x128xf32>
    %75 = arith.mulf %74, %73 : vector<8x128xf32>
    %76 = vector.extract_strided_slice %71 {offsets = [0, 1], sizes = [8, 1], strides = [1, 1]} : vector<8x49xf32> to vector<8x1xf32>
    %c24_i32_10 = arith.constant 24 : i32
    %77 = tpu.dynamic_rotate %54 by %c24_i32_10 dim 1 : vector<8x128xf32>, i32 -> vector<8x128xf32>
    %78 = vector.broadcast %76 : vector<8x1xf32> to vector<8x128xf32>
    %79 = arith.mulf %78, %77 : vector<8x128xf32>
    %80 = arith.addf %75, %79 : vector<8x128xf32>
    %81 = vector.extract_strided_slice %71 {offsets = [0, 2], sizes = [8, 1], strides = [1, 1]} : vector<8x49xf32> to vector<8x1xf32>
    %c24_i32_11 = arith.constant 24 : i32
    %82 = tpu.dynamic_rotate %58 by %c24_i32_11 dim 1 : vector<8x128xf32>, i32 -> vector<8x128xf32>
    %83 = vector.broadcast %81 : vector<8x1xf32> to vector<8x128xf32>
    %84 = arith.mulf %83, %82 : vector<8x128xf32>
    %85 = arith.addf %80, %84 : vector<8x128xf32>
    %86 = vector.extract_strided_slice %71 {offsets = [0, 3], sizes = [8, 1], strides = [1, 1]} : vector<8x49xf32> to vector<8x1xf32>
    %c24_i32_12 = arith.constant 24 : i32
    %87 = tpu.dynamic_rotate %46 by %c24_i32_12 dim 1 : vector<8x128xf32>, i32 -> vector<8x128xf32>
    %88 = vector.broadcast %86 : vector<8x1xf32> to vector<8x128xf32>
    %89 = arith.mulf %88, %87 : vector<8x128xf32>
    %90 = arith.addf %85, %89 : vector<8x128xf32>
    %91 = vector.extract_strided_slice %71 {offsets = [0, 4], sizes = [8, 1], strides = [1, 1]} : vector<8x49xf32> to vector<8x1xf32>
    %c24_i32_13 = arith.constant 24 : i32
    %92 = tpu.dynamic_rotate %62 by %c24_i32_13 dim 1 : vector<8x128xf32>, i32 -> vector<8x128xf32>
    %93 = vector.broadcast %91 : vector<8x1xf32> to vector<8x128xf32>
    %94 = arith.mulf %93, %92 : vector<8x128xf32>
    %95 = arith.addf %90, %94 : vector<8x128xf32>
    %96 = vector.extract_strided_slice %71 {offsets = [0, 5], sizes = [8, 1], strides = [1, 1]} : vector<8x49xf32> to vector<8x1xf32>
    %c24_i32_14 = arith.constant 24 : i32
    %97 = tpu.dynamic_rotate %66 by %c24_i32_14 dim 1 : vector<8x128xf32>, i32 -> vector<8x128xf32>
    %98 = vector.broadcast %96 : vector<8x1xf32> to vector<8x128xf32>
    %99 = arith.mulf %98, %97 : vector<8x128xf32>
    %100 = arith.addf %95, %99 : vector<8x128xf32>
    %101 = vector.extract_strided_slice %71 {offsets = [0, 6], sizes = [8, 1], strides = [1, 1]} : vector<8x49xf32> to vector<8x1xf32>
    %c24_i32_15 = arith.constant 24 : i32
    %102 = tpu.dynamic_rotate %70 by %c24_i32_15 dim 1 : vector<8x128xf32>, i32 -> vector<8x128xf32>
    %103 = vector.broadcast %101 : vector<8x1xf32> to vector<8x128xf32>
    %104 = arith.mulf %103, %102 : vector<8x128xf32>
    %105 = arith.addf %100, %104 : vector<8x128xf32>
    %106 = vector.extract_strided_slice %0 {offsets = [0, 0], sizes = [1, 128], strides = [1, 1]} : vector<14x128xf32> to vector<1x128xf32>
    %107 = vector.broadcast %106 : vector<1x128xf32> to vector<8x128xf32>
    %108 = arith.mulf %105, %107 : vector<8x128xf32>
    %109 = vector.extract_strided_slice %71 {offsets = [0, 7], sizes = [8, 1], strides = [1, 1]} : vector<8x49xf32> to vector<8x1xf32>
    %c16_i32 = arith.constant 16 : i32
    %110 = tpu.dynamic_rotate %50 by %c16_i32 dim 1 : vector<8x128xf32>, i32 -> vector<8x128xf32>
    %111 = vector.broadcast %109 : vector<8x1xf32> to vector<8x128xf32>
    %112 = arith.mulf %111, %110 : vector<8x128xf32>
    %113 = vector.extract_strided_slice %71 {offsets = [0, 8], sizes = [8, 1], strides = [1, 1]} : vector<8x49xf32> to vector<8x1xf32>
    %c16_i32_16 = arith.constant 16 : i32
    %114 = tpu.dynamic_rotate %54 by %c16_i32_16 dim 1 : vector<8x128xf32>, i32 -> vector<8x128xf32>
    %115 = vector.broadcast %113 : vector<8x1xf32> to vector<8x128xf32>
    %116 = arith.mulf %115, %114 : vector<8x128xf32>
    %117 = arith.addf %112, %116 : vector<8x128xf32>
    %118 = vector.extract_strided_slice %71 {offsets = [0, 9], sizes = [8, 1], strides = [1, 1]} : vector<8x49xf32> to vector<8x1xf32>
    %c16_i32_17 = arith.constant 16 : i32
    %119 = tpu.dynamic_rotate %58 by %c16_i32_17 dim 1 : vector<8x128xf32>, i32 -> vector<8x128xf32>
    %120 = vector.broadcast %118 : vector<8x1xf32> to vector<8x128xf32>
    %121 = arith.mulf %120, %119 : vector<8x128xf32>
    %122 = arith.addf %117, %121 : vector<8x128xf32>
    %123 = vector.extract_strided_slice %71 {offsets = [0, 10], sizes = [8, 1], strides = [1, 1]} : vector<8x49xf32> to vector<8x1xf32>
    %c16_i32_18 = arith.constant 16 : i32
    %124 = tpu.dynamic_rotate %46 by %c16_i32_18 dim 1 : vector<8x128xf32>, i32 -> vector<8x128xf32>
    %125 = vector.broadcast %123 : vector<8x1xf32> to vector<8x128xf32>
    %126 = arith.mulf %125, %124 : vector<8x128xf32>
    %127 = arith.addf %122, %126 : vector<8x128xf32>
    %128 = vector.extract_strided_slice %71 {offsets = [0, 11], sizes = [8, 1], strides = [1, 1]} : vector<8x49xf32> to vector<8x1xf32>
    %c16_i32_19 = arith.constant 16 : i32
    %129 = tpu.dynamic_rotate %62 by %c16_i32_19 dim 1 : vector<8x128xf32>, i32 -> vector<8x128xf32>
    %130 = vector.broadcast %128 : vector<8x1xf32> to vector<8x128xf32>
    %131 = arith.mulf %130, %129 : vector<8x128xf32>
    %132 = arith.addf %127, %131 : vector<8x128xf32>
    %133 = vector.extract_strided_slice %71 {offsets = [0, 12], sizes = [8, 1], strides = [1, 1]} : vector<8x49xf32> to vector<8x1xf32>
    %c16_i32_20 = arith.constant 16 : i32
    %134 = tpu.dynamic_rotate %66 by %c16_i32_20 dim 1 : vector<8x128xf32>, i32 -> vector<8x128xf32>
    %135 = vector.broadcast %133 : vector<8x1xf32> to vector<8x128xf32>
    %136 = arith.mulf %135, %134 : vector<8x128xf32>
    %137 = arith.addf %132, %136 : vector<8x128xf32>
    %138 = vector.extract_strided_slice %71 {offsets = [0, 13], sizes = [8, 1], strides = [1, 1]} : vector<8x49xf32> to vector<8x1xf32>
    %c16_i32_21 = arith.constant 16 : i32
    %139 = tpu.dynamic_rotate %70 by %c16_i32_21 dim 1 : vector<8x128xf32>, i32 -> vector<8x128xf32>
    %140 = vector.broadcast %138 : vector<8x1xf32> to vector<8x128xf32>
    %141 = arith.mulf %140, %139 : vector<8x128xf32>
    %142 = arith.addf %137, %141 : vector<8x128xf32>
    %143 = vector.extract_strided_slice %0 {offsets = [1, 0], sizes = [1, 128], strides = [1, 1]} : vector<14x128xf32> to vector<1x128xf32>
    %144 = vector.broadcast %143 : vector<1x128xf32> to vector<8x128xf32>
    %145 = arith.mulf %142, %144 : vector<8x128xf32>
    %146 = vector.extract_strided_slice %71 {offsets = [0, 14], sizes = [8, 1], strides = [1, 1]} : vector<8x49xf32> to vector<8x1xf32>
    %c8_i32_22 = arith.constant 8 : i32
    %147 = tpu.dynamic_rotate %50 by %c8_i32_22 dim 1 : vector<8x128xf32>, i32 -> vector<8x128xf32>
    %148 = vector.broadcast %146 : vector<8x1xf32> to vector<8x128xf32>
    %149 = arith.mulf %148, %147 : vector<8x128xf32>
    %150 = vector.extract_strided_slice %71 {offsets = [0, 15], sizes = [8, 1], strides = [1, 1]} : vector<8x49xf32> to vector<8x1xf32>
    %c8_i32_23 = arith.constant 8 : i32
    %151 = tpu.dynamic_rotate %54 by %c8_i32_23 dim 1 : vector<8x128xf32>, i32 -> vector<8x128xf32>
    %152 = vector.broadcast %150 : vector<8x1xf32> to vector<8x128xf32>
    %153 = arith.mulf %152, %151 : vector<8x128xf32>
    %154 = arith.addf %149, %153 : vector<8x128xf32>
    %155 = vector.extract_strided_slice %71 {offsets = [0, 16], sizes = [8, 1], strides = [1, 1]} : vector<8x49xf32> to vector<8x1xf32>
    %c8_i32_24 = arith.constant 8 : i32
    %156 = tpu.dynamic_rotate %58 by %c8_i32_24 dim 1 : vector<8x128xf32>, i32 -> vector<8x128xf32>
    %157 = vector.broadcast %155 : vector<8x1xf32> to vector<8x128xf32>
    %158 = arith.mulf %157, %156 : vector<8x128xf32>
    %159 = arith.addf %154, %158 : vector<8x128xf32>
    %160 = vector.extract_strided_slice %71 {offsets = [0, 17], sizes = [8, 1], strides = [1, 1]} : vector<8x49xf32> to vector<8x1xf32>
    %c8_i32_25 = arith.constant 8 : i32
    %161 = tpu.dynamic_rotate %46 by %c8_i32_25 dim 1 : vector<8x128xf32>, i32 -> vector<8x128xf32>
    %162 = vector.broadcast %160 : vector<8x1xf32> to vector<8x128xf32>
    %163 = arith.mulf %162, %161 : vector<8x128xf32>
    %164 = arith.addf %159, %163 : vector<8x128xf32>
    %165 = vector.extract_strided_slice %71 {offsets = [0, 18], sizes = [8, 1], strides = [1, 1]} : vector<8x49xf32> to vector<8x1xf32>
    %c8_i32_26 = arith.constant 8 : i32
    %166 = tpu.dynamic_rotate %62 by %c8_i32_26 dim 1 : vector<8x128xf32>, i32 -> vector<8x128xf32>
    %167 = vector.broadcast %165 : vector<8x1xf32> to vector<8x128xf32>
    %168 = arith.mulf %167, %166 : vector<8x128xf32>
    %169 = arith.addf %164, %168 : vector<8x128xf32>
    %170 = vector.extract_strided_slice %71 {offsets = [0, 19], sizes = [8, 1], strides = [1, 1]} : vector<8x49xf32> to vector<8x1xf32>
    %c8_i32_27 = arith.constant 8 : i32
    %171 = tpu.dynamic_rotate %66 by %c8_i32_27 dim 1 : vector<8x128xf32>, i32 -> vector<8x128xf32>
    %172 = vector.broadcast %170 : vector<8x1xf32> to vector<8x128xf32>
    %173 = arith.mulf %172, %171 : vector<8x128xf32>
    %174 = arith.addf %169, %173 : vector<8x128xf32>
    %175 = vector.extract_strided_slice %71 {offsets = [0, 20], sizes = [8, 1], strides = [1, 1]} : vector<8x49xf32> to vector<8x1xf32>
    %c8_i32_28 = arith.constant 8 : i32
    %176 = tpu.dynamic_rotate %70 by %c8_i32_28 dim 1 : vector<8x128xf32>, i32 -> vector<8x128xf32>
    %177 = vector.broadcast %175 : vector<8x1xf32> to vector<8x128xf32>
    %178 = arith.mulf %177, %176 : vector<8x128xf32>
    %179 = arith.addf %174, %178 : vector<8x128xf32>
    %180 = vector.extract_strided_slice %0 {offsets = [2, 0], sizes = [1, 128], strides = [1, 1]} : vector<14x128xf32> to vector<1x128xf32>
    %181 = vector.broadcast %180 : vector<1x128xf32> to vector<8x128xf32>
    %182 = arith.mulf %179, %181 : vector<8x128xf32>
    %183 = vector.extract_strided_slice %71 {offsets = [0, 21], sizes = [8, 1], strides = [1, 1]} : vector<8x49xf32> to vector<8x1xf32>
    %184 = vector.broadcast %183 : vector<8x1xf32> to vector<8x128xf32>
    %185 = arith.mulf %184, %50 : vector<8x128xf32>
    %186 = vector.extract_strided_slice %71 {offsets = [0, 22], sizes = [8, 1], strides = [1, 1]} : vector<8x49xf32> to vector<8x1xf32>
    %187 = vector.broadcast %186 : vector<8x1xf32> to vector<8x128xf32>
    %188 = arith.mulf %187, %54 : vector<8x128xf32>
    %189 = arith.addf %185, %188 : vector<8x128xf32>
    %190 = vector.extract_strided_slice %71 {offsets = [0, 23], sizes = [8, 1], strides = [1, 1]} : vector<8x49xf32> to vector<8x1xf32>
    %191 = vector.broadcast %190 : vector<8x1xf32> to vector<8x128xf32>
    %192 = arith.mulf %191, %58 : vector<8x128xf32>
    %193 = arith.addf %189, %192 : vector<8x128xf32>
    %194 = vector.extract_strided_slice %71 {offsets = [0, 24], sizes = [8, 1], strides = [1, 1]} : vector<8x49xf32> to vector<8x1xf32>
    %195 = vector.broadcast %194 : vector<8x1xf32> to vector<8x128xf32>
    %196 = arith.mulf %195, %46 : vector<8x128xf32>
    %197 = arith.addf %193, %196 : vector<8x128xf32>
    %198 = vector.extract_strided_slice %71 {offsets = [0, 25], sizes = [8, 1], strides = [1, 1]} : vector<8x49xf32> to vector<8x1xf32>
    %199 = vector.broadcast %198 : vector<8x1xf32> to vector<8x128xf32>
    %200 = arith.mulf %199, %62 : vector<8x128xf32>
    %201 = arith.addf %197, %200 : vector<8x128xf32>
    %202 = vector.extract_strided_slice %71 {offsets = [0, 26], sizes = [8, 1], strides = [1, 1]} : vector<8x49xf32> to vector<8x1xf32>
    %203 = vector.broadcast %202 : vector<8x1xf32> to vector<8x128xf32>
    %204 = arith.mulf %203, %66 : vector<8x128xf32>
    %205 = arith.addf %201, %204 : vector<8x128xf32>
    %206 = vector.extract_strided_slice %71 {offsets = [0, 27], sizes = [8, 1], strides = [1, 1]} : vector<8x49xf32> to vector<8x1xf32>
    %207 = vector.broadcast %206 : vector<8x1xf32> to vector<8x128xf32>
    %208 = arith.mulf %207, %70 : vector<8x128xf32>
    %209 = arith.addf %205, %208 : vector<8x128xf32>
    %210 = vector.extract_strided_slice %71 {offsets = [0, 28], sizes = [8, 1], strides = [1, 1]} : vector<8x49xf32> to vector<8x1xf32>
    %c120_i32_29 = arith.constant 120 : i32
    %211 = tpu.dynamic_rotate %50 by %c120_i32_29 dim 1 : vector<8x128xf32>, i32 -> vector<8x128xf32>
    %212 = vector.broadcast %210 : vector<8x1xf32> to vector<8x128xf32>
    %213 = arith.mulf %212, %211 : vector<8x128xf32>
    %214 = vector.extract_strided_slice %71 {offsets = [0, 29], sizes = [8, 1], strides = [1, 1]} : vector<8x49xf32> to vector<8x1xf32>
    %c120_i32_30 = arith.constant 120 : i32
    %215 = tpu.dynamic_rotate %54 by %c120_i32_30 dim 1 : vector<8x128xf32>, i32 -> vector<8x128xf32>
    %216 = vector.broadcast %214 : vector<8x1xf32> to vector<8x128xf32>
    %217 = arith.mulf %216, %215 : vector<8x128xf32>
    %218 = arith.addf %213, %217 : vector<8x128xf32>
    %219 = vector.extract_strided_slice %71 {offsets = [0, 30], sizes = [8, 1], strides = [1, 1]} : vector<8x49xf32> to vector<8x1xf32>
    %c120_i32_31 = arith.constant 120 : i32
    %220 = tpu.dynamic_rotate %58 by %c120_i32_31 dim 1 : vector<8x128xf32>, i32 -> vector<8x128xf32>
    %221 = vector.broadcast %219 : vector<8x1xf32> to vector<8x128xf32>
    %222 = arith.mulf %221, %220 : vector<8x128xf32>
    %223 = arith.addf %218, %222 : vector<8x128xf32>
    %224 = vector.extract_strided_slice %71 {offsets = [0, 31], sizes = [8, 1], strides = [1, 1]} : vector<8x49xf32> to vector<8x1xf32>
    %c120_i32_32 = arith.constant 120 : i32
    %225 = tpu.dynamic_rotate %46 by %c120_i32_32 dim 1 : vector<8x128xf32>, i32 -> vector<8x128xf32>
    %226 = vector.broadcast %224 : vector<8x1xf32> to vector<8x128xf32>
    %227 = arith.mulf %226, %225 : vector<8x128xf32>
    %228 = arith.addf %223, %227 : vector<8x128xf32>
    %229 = vector.extract_strided_slice %71 {offsets = [0, 32], sizes = [8, 1], strides = [1, 1]} : vector<8x49xf32> to vector<8x1xf32>
    %c120_i32_33 = arith.constant 120 : i32
    %230 = tpu.dynamic_rotate %62 by %c120_i32_33 dim 1 : vector<8x128xf32>, i32 -> vector<8x128xf32>
    %231 = vector.broadcast %229 : vector<8x1xf32> to vector<8x128xf32>
    %232 = arith.mulf %231, %230 : vector<8x128xf32>
    %233 = arith.addf %228, %232 : vector<8x128xf32>
    %234 = vector.extract_strided_slice %71 {offsets = [0, 33], sizes = [8, 1], strides = [1, 1]} : vector<8x49xf32> to vector<8x1xf32>
    %c120_i32_34 = arith.constant 120 : i32
    %235 = tpu.dynamic_rotate %66 by %c120_i32_34 dim 1 : vector<8x128xf32>, i32 -> vector<8x128xf32>
    %236 = vector.broadcast %234 : vector<8x1xf32> to vector<8x128xf32>
    %237 = arith.mulf %236, %235 : vector<8x128xf32>
    %238 = arith.addf %233, %237 : vector<8x128xf32>
    %239 = vector.extract_strided_slice %71 {offsets = [0, 34], sizes = [8, 1], strides = [1, 1]} : vector<8x49xf32> to vector<8x1xf32>
    %c120_i32_35 = arith.constant 120 : i32
    %240 = tpu.dynamic_rotate %70 by %c120_i32_35 dim 1 : vector<8x128xf32>, i32 -> vector<8x128xf32>
    %241 = vector.broadcast %239 : vector<8x1xf32> to vector<8x128xf32>
    %242 = arith.mulf %241, %240 : vector<8x128xf32>
    %243 = arith.addf %238, %242 : vector<8x128xf32>
    %244 = vector.extract_strided_slice %0 {offsets = [4, 0], sizes = [1, 128], strides = [1, 1]} : vector<14x128xf32> to vector<1x128xf32>
    %245 = vector.broadcast %244 : vector<1x128xf32> to vector<8x128xf32>
    %246 = arith.mulf %243, %245 : vector<8x128xf32>
    %247 = vector.extract_strided_slice %71 {offsets = [0, 35], sizes = [8, 1], strides = [1, 1]} : vector<8x49xf32> to vector<8x1xf32>
    %c112_i32 = arith.constant 112 : i32
    %248 = tpu.dynamic_rotate %50 by %c112_i32 dim 1 : vector<8x128xf32>, i32 -> vector<8x128xf32>
    %249 = vector.broadcast %247 : vector<8x1xf32> to vector<8x128xf32>
    %250 = arith.mulf %249, %248 : vector<8x128xf32>
    %251 = vector.extract_strided_slice %71 {offsets = [0, 36], sizes = [8, 1], strides = [1, 1]} : vector<8x49xf32> to vector<8x1xf32>
    %c112_i32_36 = arith.constant 112 : i32
    %252 = tpu.dynamic_rotate %54 by %c112_i32_36 dim 1 : vector<8x128xf32>, i32 -> vector<8x128xf32>
    %253 = vector.broadcast %251 : vector<8x1xf32> to vector<8x128xf32>
    %254 = arith.mulf %253, %252 : vector<8x128xf32>
    %255 = arith.addf %250, %254 : vector<8x128xf32>
    %256 = vector.extract_strided_slice %71 {offsets = [0, 37], sizes = [8, 1], strides = [1, 1]} : vector<8x49xf32> to vector<8x1xf32>
    %c112_i32_37 = arith.constant 112 : i32
    %257 = tpu.dynamic_rotate %58 by %c112_i32_37 dim 1 : vector<8x128xf32>, i32 -> vector<8x128xf32>
    %258 = vector.broadcast %256 : vector<8x1xf32> to vector<8x128xf32>
    %259 = arith.mulf %258, %257 : vector<8x128xf32>
    %260 = arith.addf %255, %259 : vector<8x128xf32>
    %261 = vector.extract_strided_slice %71 {offsets = [0, 38], sizes = [8, 1], strides = [1, 1]} : vector<8x49xf32> to vector<8x1xf32>
    %c112_i32_38 = arith.constant 112 : i32
    %262 = tpu.dynamic_rotate %46 by %c112_i32_38 dim 1 : vector<8x128xf32>, i32 -> vector<8x128xf32>
    %263 = vector.broadcast %261 : vector<8x1xf32> to vector<8x128xf32>
    %264 = arith.mulf %263, %262 : vector<8x128xf32>
    %265 = arith.addf %260, %264 : vector<8x128xf32>
    %266 = vector.extract_strided_slice %71 {offsets = [0, 39], sizes = [8, 1], strides = [1, 1]} : vector<8x49xf32> to vector<8x1xf32>
    %c112_i32_39 = arith.constant 112 : i32
    %267 = tpu.dynamic_rotate %62 by %c112_i32_39 dim 1 : vector<8x128xf32>, i32 -> vector<8x128xf32>
    %268 = vector.broadcast %266 : vector<8x1xf32> to vector<8x128xf32>
    %269 = arith.mulf %268, %267 : vector<8x128xf32>
    %270 = arith.addf %265, %269 : vector<8x128xf32>
    %271 = vector.extract_strided_slice %71 {offsets = [0, 40], sizes = [8, 1], strides = [1, 1]} : vector<8x49xf32> to vector<8x1xf32>
    %c112_i32_40 = arith.constant 112 : i32
    %272 = tpu.dynamic_rotate %66 by %c112_i32_40 dim 1 : vector<8x128xf32>, i32 -> vector<8x128xf32>
    %273 = vector.broadcast %271 : vector<8x1xf32> to vector<8x128xf32>
    %274 = arith.mulf %273, %272 : vector<8x128xf32>
    %275 = arith.addf %270, %274 : vector<8x128xf32>
    %276 = vector.extract_strided_slice %71 {offsets = [0, 41], sizes = [8, 1], strides = [1, 1]} : vector<8x49xf32> to vector<8x1xf32>
    %c112_i32_41 = arith.constant 112 : i32
    %277 = tpu.dynamic_rotate %70 by %c112_i32_41 dim 1 : vector<8x128xf32>, i32 -> vector<8x128xf32>
    %278 = vector.broadcast %276 : vector<8x1xf32> to vector<8x128xf32>
    %279 = arith.mulf %278, %277 : vector<8x128xf32>
    %280 = arith.addf %275, %279 : vector<8x128xf32>
    %281 = vector.extract_strided_slice %0 {offsets = [5, 0], sizes = [1, 128], strides = [1, 1]} : vector<14x128xf32> to vector<1x128xf32>
    %282 = vector.broadcast %281 : vector<1x128xf32> to vector<8x128xf32>
    %283 = arith.mulf %280, %282 : vector<8x128xf32>
    %284 = vector.extract_strided_slice %71 {offsets = [0, 42], sizes = [8, 1], strides = [1, 1]} : vector<8x49xf32> to vector<8x1xf32>
    %c104_i32 = arith.constant 104 : i32
    %285 = tpu.dynamic_rotate %50 by %c104_i32 dim 1 : vector<8x128xf32>, i32 -> vector<8x128xf32>
    %286 = vector.broadcast %284 : vector<8x1xf32> to vector<8x128xf32>
    %287 = arith.mulf %286, %285 : vector<8x128xf32>
    %288 = vector.extract_strided_slice %71 {offsets = [0, 43], sizes = [8, 1], strides = [1, 1]} : vector<8x49xf32> to vector<8x1xf32>
    %c104_i32_42 = arith.constant 104 : i32
    %289 = tpu.dynamic_rotate %54 by %c104_i32_42 dim 1 : vector<8x128xf32>, i32 -> vector<8x128xf32>
    %290 = vector.broadcast %288 : vector<8x1xf32> to vector<8x128xf32>
    %291 = arith.mulf %290, %289 : vector<8x128xf32>
    %292 = arith.addf %287, %291 : vector<8x128xf32>
    %293 = vector.extract_strided_slice %71 {offsets = [0, 44], sizes = [8, 1], strides = [1, 1]} : vector<8x49xf32> to vector<8x1xf32>
    %c104_i32_43 = arith.constant 104 : i32
    %294 = tpu.dynamic_rotate %58 by %c104_i32_43 dim 1 : vector<8x128xf32>, i32 -> vector<8x128xf32>
    %295 = vector.broadcast %293 : vector<8x1xf32> to vector<8x128xf32>
    %296 = arith.mulf %295, %294 : vector<8x128xf32>
    %297 = arith.addf %292, %296 : vector<8x128xf32>
    %298 = vector.extract_strided_slice %71 {offsets = [0, 45], sizes = [8, 1], strides = [1, 1]} : vector<8x49xf32> to vector<8x1xf32>
    %c104_i32_44 = arith.constant 104 : i32
    %299 = tpu.dynamic_rotate %46 by %c104_i32_44 dim 1 : vector<8x128xf32>, i32 -> vector<8x128xf32>
    %300 = vector.broadcast %298 : vector<8x1xf32> to vector<8x128xf32>
    %301 = arith.mulf %300, %299 : vector<8x128xf32>
    %302 = arith.addf %297, %301 : vector<8x128xf32>
    %303 = vector.extract_strided_slice %71 {offsets = [0, 46], sizes = [8, 1], strides = [1, 1]} : vector<8x49xf32> to vector<8x1xf32>
    %c104_i32_45 = arith.constant 104 : i32
    %304 = tpu.dynamic_rotate %62 by %c104_i32_45 dim 1 : vector<8x128xf32>, i32 -> vector<8x128xf32>
    %305 = vector.broadcast %303 : vector<8x1xf32> to vector<8x128xf32>
    %306 = arith.mulf %305, %304 : vector<8x128xf32>
    %307 = arith.addf %302, %306 : vector<8x128xf32>
    %308 = vector.extract_strided_slice %71 {offsets = [0, 47], sizes = [8, 1], strides = [1, 1]} : vector<8x49xf32> to vector<8x1xf32>
    %c104_i32_46 = arith.constant 104 : i32
    %309 = tpu.dynamic_rotate %66 by %c104_i32_46 dim 1 : vector<8x128xf32>, i32 -> vector<8x128xf32>
    %310 = vector.broadcast %308 : vector<8x1xf32> to vector<8x128xf32>
    %311 = arith.mulf %310, %309 : vector<8x128xf32>
    %312 = arith.addf %307, %311 : vector<8x128xf32>
    %313 = vector.extract_strided_slice %71 {offsets = [0, 48], sizes = [8, 1], strides = [1, 1]} : vector<8x49xf32> to vector<8x1xf32>
    %c104_i32_47 = arith.constant 104 : i32
    %314 = tpu.dynamic_rotate %70 by %c104_i32_47 dim 1 : vector<8x128xf32>, i32 -> vector<8x128xf32>
    %315 = vector.broadcast %313 : vector<8x1xf32> to vector<8x128xf32>
    %316 = arith.mulf %315, %314 : vector<8x128xf32>
    %317 = arith.addf %312, %316 : vector<8x128xf32>
    %318 = vector.extract_strided_slice %0 {offsets = [6, 0], sizes = [1, 128], strides = [1, 1]} : vector<14x128xf32> to vector<1x128xf32>
    %319 = vector.broadcast %318 : vector<1x128xf32> to vector<8x128xf32>
    %320 = arith.mulf %317, %319 : vector<8x128xf32>
    %321 = arith.addf %108, %145 : vector<8x128xf32>
    %322 = arith.addf %182, %209 : vector<8x128xf32>
    %323 = arith.addf %246, %283 : vector<8x128xf32>
    %324 = arith.addf %321, %322 : vector<8x128xf32>
    %325 = arith.addf %323, %320 : vector<8x128xf32>
    %326 = arith.addf %324, %325 : vector<8x128xf32>
    %327 = vector.broadcast %5 : vector<8x1xf32> to vector<8x128xf32>
    %328 = arith.addf %327, %326 : vector<8x128xf32>
    %cst_48 = arith.constant 0.000000e+00 : f32
    %329 = vector.broadcast %cst_48 : f32 to vector<8x128xf32>
    %330 = arith.maximumf %328, %329 : vector<8x128xf32>
    %331 = vector.extract_strided_slice %2 {offsets = [0, 85], sizes = [8, 8], strides = [1, 1]} : vector<8x128xf32> to vector<8x8xf32>
    %cst_49 = arith.constant dense<0.000000e+00> : vector<8x128xf32>
    %332 = tpu.matmul %331, %330, %cst_49 {dimension_numbers = #tpu.dot_dimension_numbers<[1], [0], [0], [1], [0, 0, 1, 1], [], []>} : vector<8x8xf32>, vector<8x128xf32>, vector<8x128xf32> -> vector<8x128xf32>
    %333 = vector.broadcast %6 : vector<8x1xf32> to vector<8x128xf32>
    %334 = arith.addf %333, %332 : vector<8x128xf32>
    %cst_50 = arith.constant 0.000000e+00 : f32
    %335 = vector.broadcast %cst_50 : f32 to vector<8x128xf32>
    %336 = arith.maximumf %334, %335 : vector<8x128xf32>
    %337 = tpu.concatenate %37, %336 in 0 : vector<8x128xf32>, vector<8x128xf32> -> vector<16x128xf32>
    %338 = vector.extract_strided_slice %2 {offsets = [0, 93], sizes = [8, 16], strides = [1, 1]} : vector<8x128xf32> to vector<8x16xf32>
    %cst_51 = arith.constant dense<0.000000e+00> : vector<8x128xf32>
    %339 = tpu.matmul %338, %337, %cst_51 {dimension_numbers = #tpu.dot_dimension_numbers<[1], [0], [0], [1], [0, 0, 1, 1], [], []>} : vector<8x16xf32>, vector<16x128xf32>, vector<8x128xf32> -> vector<8x128xf32>
    %340 = vector.broadcast %7 : vector<8x1xf32> to vector<8x128xf32>
    %341 = arith.addf %340, %339 : vector<8x128xf32>
    %cst_52 = arith.constant 0.000000e+00 : f32
    %342 = vector.broadcast %cst_52 : f32 to vector<8x128xf32>
    %343 = arith.maximumf %341, %342 : vector<8x128xf32>
    %c0_53 = arith.constant 0 : index
    %c0_54 = arith.constant 0 : index
    %344 = vector.load %arg4[%c0_53, %c0_54] : memref<8x128xf32, #tpu.memory_space<vmem>>, vector<8x128xf32>
    %345 = vector.extract_strided_slice %344 {offsets = [0, 121], sizes = [8, 1], strides = [1, 1]} : vector<8x128xf32> to vector<8x1xf32>
    %346 = vector.extract_strided_slice %344 {offsets = [0, 122], sizes = [8, 1], strides = [1, 1]} : vector<8x128xf32> to vector<8x1xf32>
    %347 = vector.extract_strided_slice %344 {offsets = [0, 123], sizes = [8, 1], strides = [1, 1]} : vector<8x128xf32> to vector<8x1xf32>
    %348 = vector.extract_strided_slice %344 {offsets = [0, 124], sizes = [8, 1], strides = [1, 1]} : vector<8x128xf32> to vector<8x1xf32>
    %349 = vector.extract_strided_slice %344 {offsets = [0, 125], sizes = [8, 1], strides = [1, 1]} : vector<8x128xf32> to vector<8x1xf32>
    %c8_i32_55 = arith.constant 8 : i32
    %350 = tpu.dynamic_rotate %343 by %c8_i32_55 dim 1 : vector<8x128xf32>, i32 -> vector<8x128xf32>
    %351 = vector.extract_strided_slice %0 {offsets = [2, 0], sizes = [1, 128], strides = [1, 1]} : vector<14x128xf32> to vector<1x128xf32>
    %352 = vector.broadcast %351 : vector<1x128xf32> to vector<8x128xf32>
    %353 = arith.mulf %350, %352 : vector<8x128xf32>
    %c120_i32_56 = arith.constant 120 : i32
    %354 = tpu.dynamic_rotate %343 by %c120_i32_56 dim 1 : vector<8x128xf32>, i32 -> vector<8x128xf32>
    %355 = vector.extract_strided_slice %0 {offsets = [4, 0], sizes = [1, 128], strides = [1, 1]} : vector<14x128xf32> to vector<1x128xf32>
    %356 = vector.broadcast %355 : vector<1x128xf32> to vector<8x128xf32>
    %357 = arith.mulf %354, %356 : vector<8x128xf32>
    %358 = tpu.concatenate %353, %343, %357 in 0 : vector<8x128xf32>, vector<8x128xf32>, vector<8x128xf32> -> vector<24x128xf32>
    %359 = vector.extract_strided_slice %344 {offsets = [0, 0], sizes = [8, 24], strides = [1, 1]} : vector<8x128xf32> to vector<8x24xf32>
    %cst_57 = arith.constant dense<0.000000e+00> : vector<8x128xf32>
    %360 = tpu.matmul %359, %358, %cst_57 {dimension_numbers = #tpu.dot_dimension_numbers<[1], [0], [0], [1], [0, 0, 1, 1], [], []>} : vector<8x24xf32>, vector<24x128xf32>, vector<8x128xf32> -> vector<8x128xf32>
    %361 = vector.broadcast %345 : vector<8x1xf32> to vector<8x128xf32>
    %362 = arith.addf %361, %360 : vector<8x128xf32>
    %cst_58 = arith.constant 0.000000e+00 : f32
    %363 = vector.broadcast %cst_58 : f32 to vector<8x128xf32>
    %364 = arith.maximumf %362, %363 : vector<8x128xf32>
    %c1_i32_59 = arith.constant 1 : i32
    %365 = tpu.dynamic_rotate %364 by %c1_i32_59 dim 1 : vector<8x128xf32>, i32 -> vector<8x128xf32>
    %366 = vector.extract_strided_slice %0 {offsets = [9, 0], sizes = [1, 128], strides = [1, 1]} : vector<14x128xf32> to vector<1x128xf32>
    %367 = vector.broadcast %366 : vector<1x128xf32> to vector<8x128xf32>
    %368 = arith.mulf %365, %367 : vector<8x128xf32>
    %c127_i32_60 = arith.constant 127 : i32
    %369 = tpu.dynamic_rotate %364 by %c127_i32_60 dim 1 : vector<8x128xf32>, i32 -> vector<8x128xf32>
    %370 = vector.extract_strided_slice %0 {offsets = [11, 0], sizes = [1, 128], strides = [1, 1]} : vector<14x128xf32> to vector<1x128xf32>
    %371 = vector.broadcast %370 : vector<1x128xf32> to vector<8x128xf32>
    %372 = arith.mulf %369, %371 : vector<8x128xf32>
    %373 = tpu.concatenate %368, %364, %372 in 0 : vector<8x128xf32>, vector<8x128xf32>, vector<8x128xf32> -> vector<24x128xf32>
    %374 = vector.extract_strided_slice %344 {offsets = [0, 24], sizes = [8, 24], strides = [1, 1]} : vector<8x128xf32> to vector<8x24xf32>
    %cst_61 = arith.constant dense<0.000000e+00> : vector<8x128xf32>
    %375 = tpu.matmul %374, %373, %cst_61 {dimension_numbers = #tpu.dot_dimension_numbers<[1], [0], [0], [1], [0, 0, 1, 1], [], []>} : vector<8x24xf32>, vector<24x128xf32>, vector<8x128xf32> -> vector<8x128xf32>
    %376 = vector.broadcast %346 : vector<8x1xf32> to vector<8x128xf32>
    %377 = arith.addf %376, %375 : vector<8x128xf32>
    %cst_62 = arith.constant 0.000000e+00 : f32
    %378 = vector.broadcast %cst_62 : f32 to vector<8x128xf32>
    %379 = arith.maximumf %377, %378 : vector<8x128xf32>
    %c3_i32_63 = arith.constant 3 : i32
    %380 = tpu.dynamic_rotate %343 by %c3_i32_63 dim 1 : vector<8x128xf32>, i32 -> vector<8x128xf32>
    %381 = vector.extract_strided_slice %0 {offsets = [7, 0], sizes = [1, 128], strides = [1, 1]} : vector<14x128xf32> to vector<1x128xf32>
    %382 = vector.broadcast %381 : vector<1x128xf32> to vector<8x128xf32>
    %383 = arith.mulf %380, %382 : vector<8x128xf32>
    %c2_i32_64 = arith.constant 2 : i32
    %384 = tpu.dynamic_rotate %343 by %c2_i32_64 dim 1 : vector<8x128xf32>, i32 -> vector<8x128xf32>
    %385 = vector.extract_strided_slice %0 {offsets = [8, 0], sizes = [1, 128], strides = [1, 1]} : vector<14x128xf32> to vector<1x128xf32>
    %386 = vector.broadcast %385 : vector<1x128xf32> to vector<8x128xf32>
    %387 = arith.mulf %384, %386 : vector<8x128xf32>
    %c1_i32_65 = arith.constant 1 : i32
    %388 = tpu.dynamic_rotate %343 by %c1_i32_65 dim 1 : vector<8x128xf32>, i32 -> vector<8x128xf32>
    %389 = vector.extract_strided_slice %0 {offsets = [9, 0], sizes = [1, 128], strides = [1, 1]} : vector<14x128xf32> to vector<1x128xf32>
    %390 = vector.broadcast %389 : vector<1x128xf32> to vector<8x128xf32>
    %391 = arith.mulf %388, %390 : vector<8x128xf32>
    %c127_i32_66 = arith.constant 127 : i32
    %392 = tpu.dynamic_rotate %343 by %c127_i32_66 dim 1 : vector<8x128xf32>, i32 -> vector<8x128xf32>
    %393 = vector.extract_strided_slice %0 {offsets = [11, 0], sizes = [1, 128], strides = [1, 1]} : vector<14x128xf32> to vector<1x128xf32>
    %394 = vector.broadcast %393 : vector<1x128xf32> to vector<8x128xf32>
    %395 = arith.mulf %392, %394 : vector<8x128xf32>
    %c126_i32_67 = arith.constant 126 : i32
    %396 = tpu.dynamic_rotate %343 by %c126_i32_67 dim 1 : vector<8x128xf32>, i32 -> vector<8x128xf32>
    %397 = vector.extract_strided_slice %0 {offsets = [12, 0], sizes = [1, 128], strides = [1, 1]} : vector<14x128xf32> to vector<1x128xf32>
    %398 = vector.broadcast %397 : vector<1x128xf32> to vector<8x128xf32>
    %399 = arith.mulf %396, %398 : vector<8x128xf32>
    %c125_i32_68 = arith.constant 125 : i32
    %400 = tpu.dynamic_rotate %343 by %c125_i32_68 dim 1 : vector<8x128xf32>, i32 -> vector<8x128xf32>
    %401 = vector.extract_strided_slice %0 {offsets = [13, 0], sizes = [1, 128], strides = [1, 1]} : vector<14x128xf32> to vector<1x128xf32>
    %402 = vector.broadcast %401 : vector<1x128xf32> to vector<8x128xf32>
    %403 = arith.mulf %400, %402 : vector<8x128xf32>
    %404 = vector.extract_strided_slice %344 {offsets = [0, 48], sizes = [8, 49], strides = [1, 1]} : vector<8x128xf32> to vector<8x49xf32>
    %405 = vector.extract_strided_slice %404 {offsets = [0, 0], sizes = [8, 1], strides = [1, 1]} : vector<8x49xf32> to vector<8x1xf32>
    %c24_i32_69 = arith.constant 24 : i32
    %406 = tpu.dynamic_rotate %383 by %c24_i32_69 dim 1 : vector<8x128xf32>, i32 -> vector<8x128xf32>
    %407 = vector.broadcast %405 : vector<8x1xf32> to vector<8x128xf32>
    %408 = arith.mulf %407, %406 : vector<8x128xf32>
    %409 = vector.extract_strided_slice %404 {offsets = [0, 1], sizes = [8, 1], strides = [1, 1]} : vector<8x49xf32> to vector<8x1xf32>
    %c24_i32_70 = arith.constant 24 : i32
    %410 = tpu.dynamic_rotate %387 by %c24_i32_70 dim 1 : vector<8x128xf32>, i32 -> vector<8x128xf32>
    %411 = vector.broadcast %409 : vector<8x1xf32> to vector<8x128xf32>
    %412 = arith.mulf %411, %410 : vector<8x128xf32>
    %413 = arith.addf %408, %412 : vector<8x128xf32>
    %414 = vector.extract_strided_slice %404 {offsets = [0, 2], sizes = [8, 1], strides = [1, 1]} : vector<8x49xf32> to vector<8x1xf32>
    %c24_i32_71 = arith.constant 24 : i32
    %415 = tpu.dynamic_rotate %391 by %c24_i32_71 dim 1 : vector<8x128xf32>, i32 -> vector<8x128xf32>
    %416 = vector.broadcast %414 : vector<8x1xf32> to vector<8x128xf32>
    %417 = arith.mulf %416, %415 : vector<8x128xf32>
    %418 = arith.addf %413, %417 : vector<8x128xf32>
    %419 = vector.extract_strided_slice %404 {offsets = [0, 3], sizes = [8, 1], strides = [1, 1]} : vector<8x49xf32> to vector<8x1xf32>
    %c24_i32_72 = arith.constant 24 : i32
    %420 = tpu.dynamic_rotate %343 by %c24_i32_72 dim 1 : vector<8x128xf32>, i32 -> vector<8x128xf32>
    %421 = vector.broadcast %419 : vector<8x1xf32> to vector<8x128xf32>
    %422 = arith.mulf %421, %420 : vector<8x128xf32>
    %423 = arith.addf %418, %422 : vector<8x128xf32>
    %424 = vector.extract_strided_slice %404 {offsets = [0, 4], sizes = [8, 1], strides = [1, 1]} : vector<8x49xf32> to vector<8x1xf32>
    %c24_i32_73 = arith.constant 24 : i32
    %425 = tpu.dynamic_rotate %395 by %c24_i32_73 dim 1 : vector<8x128xf32>, i32 -> vector<8x128xf32>
    %426 = vector.broadcast %424 : vector<8x1xf32> to vector<8x128xf32>
    %427 = arith.mulf %426, %425 : vector<8x128xf32>
    %428 = arith.addf %423, %427 : vector<8x128xf32>
    %429 = vector.extract_strided_slice %404 {offsets = [0, 5], sizes = [8, 1], strides = [1, 1]} : vector<8x49xf32> to vector<8x1xf32>
    %c24_i32_74 = arith.constant 24 : i32
    %430 = tpu.dynamic_rotate %399 by %c24_i32_74 dim 1 : vector<8x128xf32>, i32 -> vector<8x128xf32>
    %431 = vector.broadcast %429 : vector<8x1xf32> to vector<8x128xf32>
    %432 = arith.mulf %431, %430 : vector<8x128xf32>
    %433 = arith.addf %428, %432 : vector<8x128xf32>
    %434 = vector.extract_strided_slice %404 {offsets = [0, 6], sizes = [8, 1], strides = [1, 1]} : vector<8x49xf32> to vector<8x1xf32>
    %c24_i32_75 = arith.constant 24 : i32
    %435 = tpu.dynamic_rotate %403 by %c24_i32_75 dim 1 : vector<8x128xf32>, i32 -> vector<8x128xf32>
    %436 = vector.broadcast %434 : vector<8x1xf32> to vector<8x128xf32>
    %437 = arith.mulf %436, %435 : vector<8x128xf32>
    %438 = arith.addf %433, %437 : vector<8x128xf32>
    %439 = vector.extract_strided_slice %0 {offsets = [0, 0], sizes = [1, 128], strides = [1, 1]} : vector<14x128xf32> to vector<1x128xf32>
    %440 = vector.broadcast %439 : vector<1x128xf32> to vector<8x128xf32>
    %441 = arith.mulf %438, %440 : vector<8x128xf32>
    %442 = vector.extract_strided_slice %404 {offsets = [0, 7], sizes = [8, 1], strides = [1, 1]} : vector<8x49xf32> to vector<8x1xf32>
    %c16_i32_76 = arith.constant 16 : i32
    %443 = tpu.dynamic_rotate %383 by %c16_i32_76 dim 1 : vector<8x128xf32>, i32 -> vector<8x128xf32>
    %444 = vector.broadcast %442 : vector<8x1xf32> to vector<8x128xf32>
    %445 = arith.mulf %444, %443 : vector<8x128xf32>
    %446 = vector.extract_strided_slice %404 {offsets = [0, 8], sizes = [8, 1], strides = [1, 1]} : vector<8x49xf32> to vector<8x1xf32>
    %c16_i32_77 = arith.constant 16 : i32
    %447 = tpu.dynamic_rotate %387 by %c16_i32_77 dim 1 : vector<8x128xf32>, i32 -> vector<8x128xf32>
    %448 = vector.broadcast %446 : vector<8x1xf32> to vector<8x128xf32>
    %449 = arith.mulf %448, %447 : vector<8x128xf32>
    %450 = arith.addf %445, %449 : vector<8x128xf32>
    %451 = vector.extract_strided_slice %404 {offsets = [0, 9], sizes = [8, 1], strides = [1, 1]} : vector<8x49xf32> to vector<8x1xf32>
    %c16_i32_78 = arith.constant 16 : i32
    %452 = tpu.dynamic_rotate %391 by %c16_i32_78 dim 1 : vector<8x128xf32>, i32 -> vector<8x128xf32>
    %453 = vector.broadcast %451 : vector<8x1xf32> to vector<8x128xf32>
    %454 = arith.mulf %453, %452 : vector<8x128xf32>
    %455 = arith.addf %450, %454 : vector<8x128xf32>
    %456 = vector.extract_strided_slice %404 {offsets = [0, 10], sizes = [8, 1], strides = [1, 1]} : vector<8x49xf32> to vector<8x1xf32>
    %c16_i32_79 = arith.constant 16 : i32
    %457 = tpu.dynamic_rotate %343 by %c16_i32_79 dim 1 : vector<8x128xf32>, i32 -> vector<8x128xf32>
    %458 = vector.broadcast %456 : vector<8x1xf32> to vector<8x128xf32>
    %459 = arith.mulf %458, %457 : vector<8x128xf32>
    %460 = arith.addf %455, %459 : vector<8x128xf32>
    %461 = vector.extract_strided_slice %404 {offsets = [0, 11], sizes = [8, 1], strides = [1, 1]} : vector<8x49xf32> to vector<8x1xf32>
    %c16_i32_80 = arith.constant 16 : i32
    %462 = tpu.dynamic_rotate %395 by %c16_i32_80 dim 1 : vector<8x128xf32>, i32 -> vector<8x128xf32>
    %463 = vector.broadcast %461 : vector<8x1xf32> to vector<8x128xf32>
    %464 = arith.mulf %463, %462 : vector<8x128xf32>
    %465 = arith.addf %460, %464 : vector<8x128xf32>
    %466 = vector.extract_strided_slice %404 {offsets = [0, 12], sizes = [8, 1], strides = [1, 1]} : vector<8x49xf32> to vector<8x1xf32>
    %c16_i32_81 = arith.constant 16 : i32
    %467 = tpu.dynamic_rotate %399 by %c16_i32_81 dim 1 : vector<8x128xf32>, i32 -> vector<8x128xf32>
    %468 = vector.broadcast %466 : vector<8x1xf32> to vector<8x128xf32>
    %469 = arith.mulf %468, %467 : vector<8x128xf32>
    %470 = arith.addf %465, %469 : vector<8x128xf32>
    %471 = vector.extract_strided_slice %404 {offsets = [0, 13], sizes = [8, 1], strides = [1, 1]} : vector<8x49xf32> to vector<8x1xf32>
    %c16_i32_82 = arith.constant 16 : i32
    %472 = tpu.dynamic_rotate %403 by %c16_i32_82 dim 1 : vector<8x128xf32>, i32 -> vector<8x128xf32>
    %473 = vector.broadcast %471 : vector<8x1xf32> to vector<8x128xf32>
    %474 = arith.mulf %473, %472 : vector<8x128xf32>
    %475 = arith.addf %470, %474 : vector<8x128xf32>
    %476 = vector.extract_strided_slice %0 {offsets = [1, 0], sizes = [1, 128], strides = [1, 1]} : vector<14x128xf32> to vector<1x128xf32>
    %477 = vector.broadcast %476 : vector<1x128xf32> to vector<8x128xf32>
    %478 = arith.mulf %475, %477 : vector<8x128xf32>
    %479 = vector.extract_strided_slice %404 {offsets = [0, 14], sizes = [8, 1], strides = [1, 1]} : vector<8x49xf32> to vector<8x1xf32>
    %c8_i32_83 = arith.constant 8 : i32
    %480 = tpu.dynamic_rotate %383 by %c8_i32_83 dim 1 : vector<8x128xf32>, i32 -> vector<8x128xf32>
    %481 = vector.broadcast %479 : vector<8x1xf32> to vector<8x128xf32>
    %482 = arith.mulf %481, %480 : vector<8x128xf32>
    %483 = vector.extract_strided_slice %404 {offsets = [0, 15], sizes = [8, 1], strides = [1, 1]} : vector<8x49xf32> to vector<8x1xf32>
    %c8_i32_84 = arith.constant 8 : i32
    %484 = tpu.dynamic_rotate %387 by %c8_i32_84 dim 1 : vector<8x128xf32>, i32 -> vector<8x128xf32>
    %485 = vector.broadcast %483 : vector<8x1xf32> to vector<8x128xf32>
    %486 = arith.mulf %485, %484 : vector<8x128xf32>
    %487 = arith.addf %482, %486 : vector<8x128xf32>
    %488 = vector.extract_strided_slice %404 {offsets = [0, 16], sizes = [8, 1], strides = [1, 1]} : vector<8x49xf32> to vector<8x1xf32>
    %c8_i32_85 = arith.constant 8 : i32
    %489 = tpu.dynamic_rotate %391 by %c8_i32_85 dim 1 : vector<8x128xf32>, i32 -> vector<8x128xf32>
    %490 = vector.broadcast %488 : vector<8x1xf32> to vector<8x128xf32>
    %491 = arith.mulf %490, %489 : vector<8x128xf32>
    %492 = arith.addf %487, %491 : vector<8x128xf32>
    %493 = vector.extract_strided_slice %404 {offsets = [0, 17], sizes = [8, 1], strides = [1, 1]} : vector<8x49xf32> to vector<8x1xf32>
    %c8_i32_86 = arith.constant 8 : i32
    %494 = tpu.dynamic_rotate %343 by %c8_i32_86 dim 1 : vector<8x128xf32>, i32 -> vector<8x128xf32>
    %495 = vector.broadcast %493 : vector<8x1xf32> to vector<8x128xf32>
    %496 = arith.mulf %495, %494 : vector<8x128xf32>
    %497 = arith.addf %492, %496 : vector<8x128xf32>
    %498 = vector.extract_strided_slice %404 {offsets = [0, 18], sizes = [8, 1], strides = [1, 1]} : vector<8x49xf32> to vector<8x1xf32>
    %c8_i32_87 = arith.constant 8 : i32
    %499 = tpu.dynamic_rotate %395 by %c8_i32_87 dim 1 : vector<8x128xf32>, i32 -> vector<8x128xf32>
    %500 = vector.broadcast %498 : vector<8x1xf32> to vector<8x128xf32>
    %501 = arith.mulf %500, %499 : vector<8x128xf32>
    %502 = arith.addf %497, %501 : vector<8x128xf32>
    %503 = vector.extract_strided_slice %404 {offsets = [0, 19], sizes = [8, 1], strides = [1, 1]} : vector<8x49xf32> to vector<8x1xf32>
    %c8_i32_88 = arith.constant 8 : i32
    %504 = tpu.dynamic_rotate %399 by %c8_i32_88 dim 1 : vector<8x128xf32>, i32 -> vector<8x128xf32>
    %505 = vector.broadcast %503 : vector<8x1xf32> to vector<8x128xf32>
    %506 = arith.mulf %505, %504 : vector<8x128xf32>
    %507 = arith.addf %502, %506 : vector<8x128xf32>
    %508 = vector.extract_strided_slice %404 {offsets = [0, 20], sizes = [8, 1], strides = [1, 1]} : vector<8x49xf32> to vector<8x1xf32>
    %c8_i32_89 = arith.constant 8 : i32
    %509 = tpu.dynamic_rotate %403 by %c8_i32_89 dim 1 : vector<8x128xf32>, i32 -> vector<8x128xf32>
    %510 = vector.broadcast %508 : vector<8x1xf32> to vector<8x128xf32>
    %511 = arith.mulf %510, %509 : vector<8x128xf32>
    %512 = arith.addf %507, %511 : vector<8x128xf32>
    %513 = vector.extract_strided_slice %0 {offsets = [2, 0], sizes = [1, 128], strides = [1, 1]} : vector<14x128xf32> to vector<1x128xf32>
    %514 = vector.broadcast %513 : vector<1x128xf32> to vector<8x128xf32>
    %515 = arith.mulf %512, %514 : vector<8x128xf32>
    %516 = vector.extract_strided_slice %404 {offsets = [0, 21], sizes = [8, 1], strides = [1, 1]} : vector<8x49xf32> to vector<8x1xf32>
    %517 = vector.broadcast %516 : vector<8x1xf32> to vector<8x128xf32>
    %518 = arith.mulf %517, %383 : vector<8x128xf32>
    %519 = vector.extract_strided_slice %404 {offsets = [0, 22], sizes = [8, 1], strides = [1, 1]} : vector<8x49xf32> to vector<8x1xf32>
    %520 = vector.broadcast %519 : vector<8x1xf32> to vector<8x128xf32>
    %521 = arith.mulf %520, %387 : vector<8x128xf32>
    %522 = arith.addf %518, %521 : vector<8x128xf32>
    %523 = vector.extract_strided_slice %404 {offsets = [0, 23], sizes = [8, 1], strides = [1, 1]} : vector<8x49xf32> to vector<8x1xf32>
    %524 = vector.broadcast %523 : vector<8x1xf32> to vector<8x128xf32>
    %525 = arith.mulf %524, %391 : vector<8x128xf32>
    %526 = arith.addf %522, %525 : vector<8x128xf32>
    %527 = vector.extract_strided_slice %404 {offsets = [0, 24], sizes = [8, 1], strides = [1, 1]} : vector<8x49xf32> to vector<8x1xf32>
    %528 = vector.broadcast %527 : vector<8x1xf32> to vector<8x128xf32>
    %529 = arith.mulf %528, %343 : vector<8x128xf32>
    %530 = arith.addf %526, %529 : vector<8x128xf32>
    %531 = vector.extract_strided_slice %404 {offsets = [0, 25], sizes = [8, 1], strides = [1, 1]} : vector<8x49xf32> to vector<8x1xf32>
    %532 = vector.broadcast %531 : vector<8x1xf32> to vector<8x128xf32>
    %533 = arith.mulf %532, %395 : vector<8x128xf32>
    %534 = arith.addf %530, %533 : vector<8x128xf32>
    %535 = vector.extract_strided_slice %404 {offsets = [0, 26], sizes = [8, 1], strides = [1, 1]} : vector<8x49xf32> to vector<8x1xf32>
    %536 = vector.broadcast %535 : vector<8x1xf32> to vector<8x128xf32>
    %537 = arith.mulf %536, %399 : vector<8x128xf32>
    %538 = arith.addf %534, %537 : vector<8x128xf32>
    %539 = vector.extract_strided_slice %404 {offsets = [0, 27], sizes = [8, 1], strides = [1, 1]} : vector<8x49xf32> to vector<8x1xf32>
    %540 = vector.broadcast %539 : vector<8x1xf32> to vector<8x128xf32>
    %541 = arith.mulf %540, %403 : vector<8x128xf32>
    %542 = arith.addf %538, %541 : vector<8x128xf32>
    %543 = vector.extract_strided_slice %404 {offsets = [0, 28], sizes = [8, 1], strides = [1, 1]} : vector<8x49xf32> to vector<8x1xf32>
    %c120_i32_90 = arith.constant 120 : i32
    %544 = tpu.dynamic_rotate %383 by %c120_i32_90 dim 1 : vector<8x128xf32>, i32 -> vector<8x128xf32>
    %545 = vector.broadcast %543 : vector<8x1xf32> to vector<8x128xf32>
    %546 = arith.mulf %545, %544 : vector<8x128xf32>
    %547 = vector.extract_strided_slice %404 {offsets = [0, 29], sizes = [8, 1], strides = [1, 1]} : vector<8x49xf32> to vector<8x1xf32>
    %c120_i32_91 = arith.constant 120 : i32
    %548 = tpu.dynamic_rotate %387 by %c120_i32_91 dim 1 : vector<8x128xf32>, i32 -> vector<8x128xf32>
    %549 = vector.broadcast %547 : vector<8x1xf32> to vector<8x128xf32>
    %550 = arith.mulf %549, %548 : vector<8x128xf32>
    %551 = arith.addf %546, %550 : vector<8x128xf32>
    %552 = vector.extract_strided_slice %404 {offsets = [0, 30], sizes = [8, 1], strides = [1, 1]} : vector<8x49xf32> to vector<8x1xf32>
    %c120_i32_92 = arith.constant 120 : i32
    %553 = tpu.dynamic_rotate %391 by %c120_i32_92 dim 1 : vector<8x128xf32>, i32 -> vector<8x128xf32>
    %554 = vector.broadcast %552 : vector<8x1xf32> to vector<8x128xf32>
    %555 = arith.mulf %554, %553 : vector<8x128xf32>
    %556 = arith.addf %551, %555 : vector<8x128xf32>
    %557 = vector.extract_strided_slice %404 {offsets = [0, 31], sizes = [8, 1], strides = [1, 1]} : vector<8x49xf32> to vector<8x1xf32>
    %c120_i32_93 = arith.constant 120 : i32
    %558 = tpu.dynamic_rotate %343 by %c120_i32_93 dim 1 : vector<8x128xf32>, i32 -> vector<8x128xf32>
    %559 = vector.broadcast %557 : vector<8x1xf32> to vector<8x128xf32>
    %560 = arith.mulf %559, %558 : vector<8x128xf32>
    %561 = arith.addf %556, %560 : vector<8x128xf32>
    %562 = vector.extract_strided_slice %404 {offsets = [0, 32], sizes = [8, 1], strides = [1, 1]} : vector<8x49xf32> to vector<8x1xf32>
    %c120_i32_94 = arith.constant 120 : i32
    %563 = tpu.dynamic_rotate %395 by %c120_i32_94 dim 1 : vector<8x128xf32>, i32 -> vector<8x128xf32>
    %564 = vector.broadcast %562 : vector<8x1xf32> to vector<8x128xf32>
    %565 = arith.mulf %564, %563 : vector<8x128xf32>
    %566 = arith.addf %561, %565 : vector<8x128xf32>
    %567 = vector.extract_strided_slice %404 {offsets = [0, 33], sizes = [8, 1], strides = [1, 1]} : vector<8x49xf32> to vector<8x1xf32>
    %c120_i32_95 = arith.constant 120 : i32
    %568 = tpu.dynamic_rotate %399 by %c120_i32_95 dim 1 : vector<8x128xf32>, i32 -> vector<8x128xf32>
    %569 = vector.broadcast %567 : vector<8x1xf32> to vector<8x128xf32>
    %570 = arith.mulf %569, %568 : vector<8x128xf32>
    %571 = arith.addf %566, %570 : vector<8x128xf32>
    %572 = vector.extract_strided_slice %404 {offsets = [0, 34], sizes = [8, 1], strides = [1, 1]} : vector<8x49xf32> to vector<8x1xf32>
    %c120_i32_96 = arith.constant 120 : i32
    %573 = tpu.dynamic_rotate %403 by %c120_i32_96 dim 1 : vector<8x128xf32>, i32 -> vector<8x128xf32>
    %574 = vector.broadcast %572 : vector<8x1xf32> to vector<8x128xf32>
    %575 = arith.mulf %574, %573 : vector<8x128xf32>
    %576 = arith.addf %571, %575 : vector<8x128xf32>
    %577 = vector.extract_strided_slice %0 {offsets = [4, 0], sizes = [1, 128], strides = [1, 1]} : vector<14x128xf32> to vector<1x128xf32>
    %578 = vector.broadcast %577 : vector<1x128xf32> to vector<8x128xf32>
    %579 = arith.mulf %576, %578 : vector<8x128xf32>
    %580 = vector.extract_strided_slice %404 {offsets = [0, 35], sizes = [8, 1], strides = [1, 1]} : vector<8x49xf32> to vector<8x1xf32>
    %c112_i32_97 = arith.constant 112 : i32
    %581 = tpu.dynamic_rotate %383 by %c112_i32_97 dim 1 : vector<8x128xf32>, i32 -> vector<8x128xf32>
    %582 = vector.broadcast %580 : vector<8x1xf32> to vector<8x128xf32>
    %583 = arith.mulf %582, %581 : vector<8x128xf32>
    %584 = vector.extract_strided_slice %404 {offsets = [0, 36], sizes = [8, 1], strides = [1, 1]} : vector<8x49xf32> to vector<8x1xf32>
    %c112_i32_98 = arith.constant 112 : i32
    %585 = tpu.dynamic_rotate %387 by %c112_i32_98 dim 1 : vector<8x128xf32>, i32 -> vector<8x128xf32>
    %586 = vector.broadcast %584 : vector<8x1xf32> to vector<8x128xf32>
    %587 = arith.mulf %586, %585 : vector<8x128xf32>
    %588 = arith.addf %583, %587 : vector<8x128xf32>
    %589 = vector.extract_strided_slice %404 {offsets = [0, 37], sizes = [8, 1], strides = [1, 1]} : vector<8x49xf32> to vector<8x1xf32>
    %c112_i32_99 = arith.constant 112 : i32
    %590 = tpu.dynamic_rotate %391 by %c112_i32_99 dim 1 : vector<8x128xf32>, i32 -> vector<8x128xf32>
    %591 = vector.broadcast %589 : vector<8x1xf32> to vector<8x128xf32>
    %592 = arith.mulf %591, %590 : vector<8x128xf32>
    %593 = arith.addf %588, %592 : vector<8x128xf32>
    %594 = vector.extract_strided_slice %404 {offsets = [0, 38], sizes = [8, 1], strides = [1, 1]} : vector<8x49xf32> to vector<8x1xf32>
    %c112_i32_100 = arith.constant 112 : i32
    %595 = tpu.dynamic_rotate %343 by %c112_i32_100 dim 1 : vector<8x128xf32>, i32 -> vector<8x128xf32>
    %596 = vector.broadcast %594 : vector<8x1xf32> to vector<8x128xf32>
    %597 = arith.mulf %596, %595 : vector<8x128xf32>
    %598 = arith.addf %593, %597 : vector<8x128xf32>
    %599 = vector.extract_strided_slice %404 {offsets = [0, 39], sizes = [8, 1], strides = [1, 1]} : vector<8x49xf32> to vector<8x1xf32>
    %c112_i32_101 = arith.constant 112 : i32
    %600 = tpu.dynamic_rotate %395 by %c112_i32_101 dim 1 : vector<8x128xf32>, i32 -> vector<8x128xf32>
    %601 = vector.broadcast %599 : vector<8x1xf32> to vector<8x128xf32>
    %602 = arith.mulf %601, %600 : vector<8x128xf32>
    %603 = arith.addf %598, %602 : vector<8x128xf32>
    %604 = vector.extract_strided_slice %404 {offsets = [0, 40], sizes = [8, 1], strides = [1, 1]} : vector<8x49xf32> to vector<8x1xf32>
    %c112_i32_102 = arith.constant 112 : i32
    %605 = tpu.dynamic_rotate %399 by %c112_i32_102 dim 1 : vector<8x128xf32>, i32 -> vector<8x128xf32>
    %606 = vector.broadcast %604 : vector<8x1xf32> to vector<8x128xf32>
    %607 = arith.mulf %606, %605 : vector<8x128xf32>
    %608 = arith.addf %603, %607 : vector<8x128xf32>
    %609 = vector.extract_strided_slice %404 {offsets = [0, 41], sizes = [8, 1], strides = [1, 1]} : vector<8x49xf32> to vector<8x1xf32>
    %c112_i32_103 = arith.constant 112 : i32
    %610 = tpu.dynamic_rotate %403 by %c112_i32_103 dim 1 : vector<8x128xf32>, i32 -> vector<8x128xf32>
    %611 = vector.broadcast %609 : vector<8x1xf32> to vector<8x128xf32>
    %612 = arith.mulf %611, %610 : vector<8x128xf32>
    %613 = arith.addf %608, %612 : vector<8x128xf32>
    %614 = vector.extract_strided_slice %0 {offsets = [5, 0], sizes = [1, 128], strides = [1, 1]} : vector<14x128xf32> to vector<1x128xf32>
    %615 = vector.broadcast %614 : vector<1x128xf32> to vector<8x128xf32>
    %616 = arith.mulf %613, %615 : vector<8x128xf32>
    %617 = vector.extract_strided_slice %404 {offsets = [0, 42], sizes = [8, 1], strides = [1, 1]} : vector<8x49xf32> to vector<8x1xf32>
    %c104_i32_104 = arith.constant 104 : i32
    %618 = tpu.dynamic_rotate %383 by %c104_i32_104 dim 1 : vector<8x128xf32>, i32 -> vector<8x128xf32>
    %619 = vector.broadcast %617 : vector<8x1xf32> to vector<8x128xf32>
    %620 = arith.mulf %619, %618 : vector<8x128xf32>
    %621 = vector.extract_strided_slice %404 {offsets = [0, 43], sizes = [8, 1], strides = [1, 1]} : vector<8x49xf32> to vector<8x1xf32>
    %c104_i32_105 = arith.constant 104 : i32
    %622 = tpu.dynamic_rotate %387 by %c104_i32_105 dim 1 : vector<8x128xf32>, i32 -> vector<8x128xf32>
    %623 = vector.broadcast %621 : vector<8x1xf32> to vector<8x128xf32>
    %624 = arith.mulf %623, %622 : vector<8x128xf32>
    %625 = arith.addf %620, %624 : vector<8x128xf32>
    %626 = vector.extract_strided_slice %404 {offsets = [0, 44], sizes = [8, 1], strides = [1, 1]} : vector<8x49xf32> to vector<8x1xf32>
    %c104_i32_106 = arith.constant 104 : i32
    %627 = tpu.dynamic_rotate %391 by %c104_i32_106 dim 1 : vector<8x128xf32>, i32 -> vector<8x128xf32>
    %628 = vector.broadcast %626 : vector<8x1xf32> to vector<8x128xf32>
    %629 = arith.mulf %628, %627 : vector<8x128xf32>
    %630 = arith.addf %625, %629 : vector<8x128xf32>
    %631 = vector.extract_strided_slice %404 {offsets = [0, 45], sizes = [8, 1], strides = [1, 1]} : vector<8x49xf32> to vector<8x1xf32>
    %c104_i32_107 = arith.constant 104 : i32
    %632 = tpu.dynamic_rotate %343 by %c104_i32_107 dim 1 : vector<8x128xf32>, i32 -> vector<8x128xf32>
    %633 = vector.broadcast %631 : vector<8x1xf32> to vector<8x128xf32>
    %634 = arith.mulf %633, %632 : vector<8x128xf32>
    %635 = arith.addf %630, %634 : vector<8x128xf32>
    %636 = vector.extract_strided_slice %404 {offsets = [0, 46], sizes = [8, 1], strides = [1, 1]} : vector<8x49xf32> to vector<8x1xf32>
    %c104_i32_108 = arith.constant 104 : i32
    %637 = tpu.dynamic_rotate %395 by %c104_i32_108 dim 1 : vector<8x128xf32>, i32 -> vector<8x128xf32>
    %638 = vector.broadcast %636 : vector<8x1xf32> to vector<8x128xf32>
    %639 = arith.mulf %638, %637 : vector<8x128xf32>
    %640 = arith.addf %635, %639 : vector<8x128xf32>
    %641 = vector.extract_strided_slice %404 {offsets = [0, 47], sizes = [8, 1], strides = [1, 1]} : vector<8x49xf32> to vector<8x1xf32>
    %c104_i32_109 = arith.constant 104 : i32
    %642 = tpu.dynamic_rotate %399 by %c104_i32_109 dim 1 : vector<8x128xf32>, i32 -> vector<8x128xf32>
    %643 = vector.broadcast %641 : vector<8x1xf32> to vector<8x128xf32>
    %644 = arith.mulf %643, %642 : vector<8x128xf32>
    %645 = arith.addf %640, %644 : vector<8x128xf32>
    %646 = vector.extract_strided_slice %404 {offsets = [0, 48], sizes = [8, 1], strides = [1, 1]} : vector<8x49xf32> to vector<8x1xf32>
    %c104_i32_110 = arith.constant 104 : i32
    %647 = tpu.dynamic_rotate %403 by %c104_i32_110 dim 1 : vector<8x128xf32>, i32 -> vector<8x128xf32>
    %648 = vector.broadcast %646 : vector<8x1xf32> to vector<8x128xf32>
    %649 = arith.mulf %648, %647 : vector<8x128xf32>
    %650 = arith.addf %645, %649 : vector<8x128xf32>
    %651 = vector.extract_strided_slice %0 {offsets = [6, 0], sizes = [1, 128], strides = [1, 1]} : vector<14x128xf32> to vector<1x128xf32>
    %652 = vector.broadcast %651 : vector<1x128xf32> to vector<8x128xf32>
    %653 = arith.mulf %650, %652 : vector<8x128xf32>
    %654 = arith.addf %441, %478 : vector<8x128xf32>
    %655 = arith.addf %515, %542 : vector<8x128xf32>
    %656 = arith.addf %579, %616 : vector<8x128xf32>
    %657 = arith.addf %654, %655 : vector<8x128xf32>
    %658 = arith.addf %656, %653 : vector<8x128xf32>
    %659 = arith.addf %657, %658 : vector<8x128xf32>
    %660 = vector.broadcast %347 : vector<8x1xf32> to vector<8x128xf32>
    %661 = arith.addf %660, %659 : vector<8x128xf32>
    %cst_111 = arith.constant 0.000000e+00 : f32
    %662 = vector.broadcast %cst_111 : f32 to vector<8x128xf32>
    %663 = arith.maximumf %661, %662 : vector<8x128xf32>
    %664 = vector.extract_strided_slice %344 {offsets = [0, 97], sizes = [8, 8], strides = [1, 1]} : vector<8x128xf32> to vector<8x8xf32>
    %cst_112 = arith.constant dense<0.000000e+00> : vector<8x128xf32>
    %665 = tpu.matmul %664, %663, %cst_112 {dimension_numbers = #tpu.dot_dimension_numbers<[1], [0], [0], [1], [0, 0, 1, 1], [], []>} : vector<8x8xf32>, vector<8x128xf32>, vector<8x128xf32> -> vector<8x128xf32>
    %666 = vector.broadcast %348 : vector<8x1xf32> to vector<8x128xf32>
    %667 = arith.addf %666, %665 : vector<8x128xf32>
    %cst_113 = arith.constant 0.000000e+00 : f32
    %668 = vector.broadcast %cst_113 : f32 to vector<8x128xf32>
    %669 = arith.maximumf %667, %668 : vector<8x128xf32>
    %670 = tpu.concatenate %379, %669 in 0 : vector<8x128xf32>, vector<8x128xf32> -> vector<16x128xf32>
    %671 = vector.extract_strided_slice %344 {offsets = [0, 105], sizes = [8, 16], strides = [1, 1]} : vector<8x128xf32> to vector<8x16xf32>
    %cst_114 = arith.constant dense<0.000000e+00> : vector<8x128xf32>
    %672 = tpu.matmul %671, %670, %cst_114 {dimension_numbers = #tpu.dot_dimension_numbers<[1], [0], [0], [1], [0, 0, 1, 1], [], []>} : vector<8x16xf32>, vector<16x128xf32>, vector<8x128xf32> -> vector<8x128xf32>
    %673 = vector.broadcast %349 : vector<8x1xf32> to vector<8x128xf32>
    %674 = arith.addf %673, %672 : vector<8x128xf32>
    %cst_115 = arith.constant 0.000000e+00 : f32
    %675 = vector.broadcast %cst_115 : f32 to vector<8x128xf32>
    %676 = arith.maximumf %674, %675 : vector<8x128xf32>
    %c0_116 = arith.constant 0 : index
    %c0_117 = arith.constant 0 : index
    %677 = vector.load %arg5[%c0_116, %c0_117] : memref<8x128xf32, #tpu.memory_space<vmem>>, vector<8x128xf32>
    tpu.vector_store %arg5[%c0_116, %c0_117], %676 {strides = array<i32>} : memref<8x128xf32, #tpu.memory_space<vmem>>, vector<8x128xf32>,
    return
  }
  func.func @transform_0(%arg0: i32) -> (i32, i32) {
    %c0_i32 = arith.constant 0 : i32
    %c0_i32_0 = arith.constant 0 : i32
    %c0_i32_1 = arith.constant 0 : i32
    return %c0_i32, %c0_i32_0 : i32, i32
  }
  func.func @transform_1(%arg0: i32) -> (i32, i32) {
    %c0_i32 = arith.constant 0 : i32
    %c0_i32_0 = arith.constant 0 : i32
    %c0_i32_1 = arith.constant 0 : i32
    return %c0_i32, %c0_i32_0 : i32, i32
  }
  func.func @transform_2(%arg0: i32) -> (i32, i32) {
    %c0_i32 = arith.constant 0 : i32
    %c0_i32_0 = arith.constant 0 : i32
    %c0_i32_1 = arith.constant 0 : i32
    return %c0_i32, %c0_i32_0 : i32, i32
  }
  func.func @transform_3(%arg0: i32) -> (i32, i32) {
    %c0_i32 = arith.constant 0 : i32
    %c0_i32_0 = arith.constant 0 : i32
    %c0_i32_1 = arith.constant 0 : i32
    return %c0_i32, %c0_i32_0 : i32, i32
  }
  func.func @transform_4(%arg0: i32) -> (i32, i32) {
    %c0_i32 = arith.constant 0 : i32
    %c0_i32_0 = arith.constant 0 : i32
    %c0_i32_1 = arith.constant 0 : i32
    return %c0_i32, %c0_i32_0 : i32, i32
  }
}

</mosaic_0001>

<llo_original>
// kernel: down_pallas.1
$region0: #{down_pallas.1}
  #allocation0 [shape = 'u32[]', space=smem, size = 0x4, offset = 0x4, fixed_abs, tag = 'smem constant byte address 0x4 - core index']
  #allocation1 [shape = 'u32[144,128]{1,0:T(1,128)}', space=vmem, size = 0x12000, scoped, tag = 'internal scratch']
  %s0 = inlined_call_operand.vmem [shape: f32[4,128], index: 0, kind: input, shape index: {}]
  %s1 = inlined_call_operand.vmem [shape: f32[14,128], index: 1, kind: input, shape index: {}]
  %s2 = inlined_call_operand.vmem [shape: f32[8,128], index: 2, kind: input, shape index: {}]
  %s3 = inlined_call_operand.vmem [shape: f32[8,128], index: 3, kind: input, shape index: {}]
  %s4 = inlined_call_operand.vmem [shape: f32[8,128], index: 4, kind: output, shape index: {}]
  %s5 = sld [smem:[#allocation0]]
  $region26: #{down_pallas.1} parent=0
    _
  %s7 = ssub.s32 1, %s5
  %s8 = scalar_select 0, %s7, %s5
  // Predicated region
  $region2: #{down_pallas.1} parent=0 // pred_check
    _
  $region3: #{down_pallas.1} parent=0 // pred_check_branch
    %10 = sbr.rel (0) target = $region5
  $region4: #{down_pallas.1} parent=0 // pred_region
    _
  $region5: #{down_pallas.1} parent=0 // pred_fallthru
    _
  // Predicated region
  $region6: #{down_pallas.1} parent=0 // pred_check
    _
  $region7: #{down_pallas.1} parent=0 // pred_check_branch
    %12 = sbr.rel (0) target = $region9
  $region8: #{down_pallas.1} parent=0 // pred_region
    _
  $region9: #{down_pallas.1} parent=0 // pred_fallthru
    _
  // Predicated region
  $region10: #{down_pallas.1} parent=0 // pred_check
    _
  $region11: #{down_pallas.1} parent=0 // pred_check_branch
    %14 = sbr.rel (0) target = $region13
  $region12: #{down_pallas.1} parent=0 // pred_region
    _
  $region13: #{down_pallas.1} parent=0 // pred_fallthru
    _
  // Predicated region
  $region14: #{down_pallas.1} parent=0 // pred_check
    _
  $region15: #{down_pallas.1} parent=0 // pred_check_branch
    %16 = sbr.rel (0) target = $region17
  $region16: #{down_pallas.1} parent=0 // pred_region
    _
  $region17: #{down_pallas.1} parent=0 // pred_fallthru
    _
  %v17 = vld [vmem:[%s1] sm:$0xff]
  %v18 = vld [vmem:[%s1 + $0x8] sm:$0x3f]
  %v19 = vld [vmem:[%s0] sm:$0xf]
  %v20 = vld [vmem:[%s2] sm:$0xff]
  %21 = vrot.lane.b32.xlu0 %v19, 8
  %v22 = vpop.permute.xlu0 %21
  %v23 = vlaneseq
  %v24 = vshrl.u32 %v23, 7
  %v25 = vsub.s32 2, %v24
  %v26 = vrot.slane %v17, %v25
  %v27 = vmul.f32 %v22, %v26
  %28 = vrot.lane.b32.xlu0 %v19, 120
  %v29 = vpop.permute.xlu0 %28
  %v30 = vlaneseq
  %v31 = vshrl.u32 %v30, 7
  %v32 = vsub.s32 4, %v31
  %v33 = vrot.slane %v17, %v32
  %v34 = vmul.f32 %v29, %v33
  %v36 = vrot.slane %v19, 4
  %vm38 = vcmask 1043456
  %v39 = vsel %vm38, %v27, %v36
  %vm40 = vcmask 97280
  %v42 = vsel %vm40, %v20, 0
  %v45 = vsel %vm38, %v34, 0
  %47 = vmatprep.subr.mxu0 0.0
  %48 = vmatpush1.msra.mxu0 0.0
  %49 = vmatprep.subr.mxu0 0.0
  %50 = vmatpush1.msra.mxu0 0.0
  %51 = vmatprep.subr.mxu0 0.0
  %52 = vmatpush1.msra.mxu0 0.0
  %53 = vmatprep.subr.mxu0 0.0
  %54 = vmatpush1.msra.mxu0 0.0
  %55 = vmatprep.subr.mxu0 0.0
  %56 = vmatpush1.msra.mxu0 0.0
  %57 = vmatprep.subr.mxu0 0.0
  %58 = vmatpush1.msra.mxu0 0.0
  %59 = vmatprep.subr.mxu0 0.0
  %60 = vmatpush1.msra.mxu0 0.0
  %61 = vmatprep.subr.mxu0 0.0
  %62 = vmatpush1.msra.mxu0 0.0
  %63 = vmatprep.subr.mxu0 0.0
  %64 = vmatpush1.msra.mxu0 0.0
  %65 = vmatprep.subr.mxu0 0.0
  %66 = vmatpush1.msra.mxu0 0.0
  %67 = vmatprep.subr.mxu0 0.0
  %68 = vmatpush1.msra.mxu0 0.0
  %69 = vmatprep.subr.mxu0 0.0
  %70 = vmatpush1.msra.mxu0 0.0
  %71 = vmatprep.subr.mxu0 0.0
  %72 = vmatpush1.msra.mxu0 0.0
  %73 = vmatprep.subr.mxu0 0.0
  %74 = vmatpush1.msra.mxu0 0.0
  %75 = vmatprep.subr.mxu0 0.0
  %76 = vmatpush1.msra.mxu0 %v45
  %77 = vmatprep.subr.mxu0 0.0
  %78 = vmatpush1.msra.mxu0 %v39
  %79 = vmatprep.subr.mxu0 0.0
  %80 = vmatpush2.msra.mxu0 0.0
  %81 = vmatprep.subr.mxu0 0.0
  %82 = vmatpush2.msra.mxu0 0.0
  %83 = vmatprep.subr.mxu0 0.0
  %84 = vmatpush2.msra.mxu0 0.0
  %85 = vmatprep.subr.mxu0 0.0
  %86 = vmatpush2.msra.mxu0 0.0
  %87 = vmatprep.subr.mxu0 0.0
  %88 = vmatpush2.msra.mxu0 0.0
  %89 = vmatprep.subr.mxu0 0.0
  %90 = vmatpush2.msra.mxu0 0.0
  %91 = vmatprep.subr.mxu0 0.0
  %92 = vmatpush2.msra.mxu0 0.0
  %93 = vmatprep.subr.mxu0 0.0
  %94 = vmatpush2.msra.mxu0 0.0
  %95 = vmatprep.subr.mxu0 0.0
  %96 = vmatpush2.msra.mxu0 0.0
  %97 = vmatprep.subr.mxu0 0.0
  %98 = vmatpush2.msra.mxu0 0.0
  %99 = vmatprep.subr.mxu0 0.0
  %100 = vmatpush2.msra.mxu0 0.0
  %101 = vmatprep.subr.mxu0 0.0
  %102 = vmatpush2.msra.mxu0 0.0
  %103 = vmatprep.subr.mxu0 0.0
  %104 = vmatpush2.msra.mxu0 0.0
  %105 = vmatprep.subr.mxu0 0.0
  %106 = vmatpush2.msra.mxu0 0.0
  %107 = vmatprep.subr.mxu0 0.0
  %108 = vmatpush2.msra.mxu0 0.0
  %109 = vmatprep.subr.mxu0 0.0
  %110 = vmatpush2.msra.mxu0 0.0
  %111 = vmatprep.mubr.f32.mxu0 0.0
  %112 = vmatmul.mubr.f32.gmra.mxu0 %v42
  %v113 = vpop.f32.mrf.mxu0
  %v114 = vadd.f32 0.0, %v113
  %v115 = vpop.f32.mrf.mxu0
  %116 = vdwg.mxu0
  %117 = vset.pattern.permute.xlu0 109
  %118 = vperm.xlu0 %117, %v20
  %v119 = vpop.permute.xlu0 %118
  %v121 = vadd.f32 %v119, %v114
  %v122 = vmax.f32 %v121, 0.0
  %123 = vrot.lane.b32.xlu0 %v122, 1
  %v124 = vpop.permute.xlu0 %123
  %v125 = vlaneseq
  %v126 = vshrl.u32 %v125, 7
  %v127 = vsub.s32 1, %v126
  %v128 = vrot.slane %v18, %v127
  %v129 = vmul.f32 %v124, %v128
  %130 = vrot.lane.b32.xlu0 %v122, 127
  %v131 = vpop.permute.xlu0 %130
  %v132 = vlaneseq
  %v133 = vshrl.u32 %v132, 7
  %v134 = vsub.s32 3, %v133
  %v135 = vrot.slane %v18, %v134
  %v136 = vmul.f32 %v131, %v135
  %137 = vrot.lane.b32.xlu0 %v20, 116
  %v138 = vpop.permute.xlu0 %137
  %vm139 = vcmask 195584
  %v140 = vsel %vm139, %v138, 0
  %142 = vmatprep.subr.mxu0 0.0
  %143 = vmatpush1.msra.mxu0 0.0
  %144 = vmatprep.subr.mxu0 0.0
  %145 = vmatpush1.msra.mxu0 0.0
  %146 = vmatprep.subr.mxu0 0.0
  %147 = vmatpush1.msra.mxu0 0.0
  %148 = vmatprep.subr.mxu0 0.0
  %149 = vmatpush1.msra.mxu0 0.0
  %150 = vmatprep.subr.mxu0 0.0
  %151 = vmatpush1.msra.mxu0 0.0
  %152 = vmatprep.subr.mxu0 0.0
  %153 = vmatpush1.msra.mxu0 0.0
  %154 = vmatprep.subr.mxu0 0.0
  %155 = vmatpush1.msra.mxu0 0.0
  %156 = vmatprep.subr.mxu0 0.0
  %157 = vmatpush1.msra.mxu0 0.0
  %158 = vmatprep.subr.mxu0 0.0
  %159 = vmatpush1.msra.mxu0 0.0
  %160 = vmatprep.subr.mxu0 0.0
  %161 = vmatpush1.msra.mxu0 0.0
  %162 = vmatprep.subr.mxu0 0.0
  %163 = vmatpush1.msra.mxu0 0.0
  %164 = vmatprep.subr.mxu0 0.0
  %165 = vmatpush1.msra.mxu0 0.0
  %166 = vmatprep.subr.mxu0 0.0
  %167 = vmatpush1.msra.mxu0 0.0
  %168 = vmatprep.subr.mxu0 0.0
  %169 = vmatpush1.msra.mxu0 %v136
  %170 = vmatprep.subr.mxu0 0.0
  %171 = vmatpush1.msra.mxu0 %v122
  %172 = vmatprep.subr.mxu0 0.0
  %173 = vmatpush1.msra.mxu0 %v129
  %174 = vmatprep.subr.mxu0 0.0
  %175 = vmatpush2.msra.mxu0 0.0
  %176 = vmatprep.subr.mxu0 0.0
  %177 = vmatpush2.msra.mxu0 0.0
  %178 = vmatprep.subr.mxu0 0.0
  %179 = vmatpush2.msra.mxu0 0.0
  %180 = vmatprep.subr.mxu0 0.0
  %181 = vmatpush2.msra.mxu0 0.0
  %182 = vmatprep.subr.mxu0 0.0
  %183 = vmatpush2.msra.mxu0 0.0
  %184 = vmatprep.subr.mxu0 0.0
  %185 = vmatpush2.msra.mxu0 0.0
  %186 = vmatprep.subr.mxu0 0.0
  %187 = vmatpush2.msra.mxu0 0.0
  %188 = vmatprep.subr.mxu0 0.0
  %189 = vmatpush2.msra.mxu0 0.0
  %190 = vmatprep.subr.mxu0 0.0
  %191 = vmatpush2.msra.mxu0 0.0
  %192 = vmatprep.subr.mxu0 0.0
  %193 = vmatpush2.msra.mxu0 0.0
  %194 = vmatprep.subr.mxu0 0.0
  %195 = vmatpush2.msra.mxu0 0.0
  %196 = vmatprep.subr.mxu0 0.0
  %197 = vmatpush2.msra.mxu0 0.0
  %198 = vmatprep.subr.mxu0 0.0
  %199 = vmatpush2.msra.mxu0 0.0
  %200 = vmatprep.subr.mxu0 0.0
  %201 = vmatpush2.msra.mxu0 0.0
  %202 = vmatprep.subr.mxu0 0.0
  %203 = vmatpush2.msra.mxu0 0.0
  %204 = vmatprep.subr.mxu0 0.0
  %205 = vmatpush2.msra.mxu0 0.0
  %206 = vmatprep.mubr.f32.mxu0 0.0
  %207 = vmatmul.mubr.f32.gmra.mxu0 %v140
  %v208 = vpop.f32.mrf.mxu0
  %v209 = vadd.f32 0.0, %v208
  %v210 = vpop.f32.mrf.mxu0
  %211 = vdwg.mxu0
  %212 = vset.pattern.permute.xlu0 110
  %213 = vperm.xlu0 %212, %v20
  %v214 = vpop.permute.xlu0 %213
  %v216 = vadd.f32 %v214, %v209
  %v217 = vmax.f32 %v216, 0.0
  %v218 = vrot.slane %v19, 7
  %v220 = vrot.slane %v19, 6
  %v222 = vrot.slane %v19, 5
  %vm224 = vcmask 1040384
  %v225 = vsel %vm224, %v19, %v218
  %vm226 = vcmask 1041408
  %v227 = vsel %vm226, %v225, %v218
  %vm228 = vcmask 1042432
  %v229 = vsel %vm228, %v227, %v220
  %v230 = vsel %vm38, %v229, %v220
  %vm231 = vcmask 1044480
  %v232 = vsel %vm231, %v230, %v222
  %vm233 = vcmask 1045504
  %v234 = vsel %vm233, %v232, %v222
  %vm235 = vcmask 1046528
  %v236 = vsel %vm235, %v234, %v36
  %237 = vrot.lane.b32.xlu0 %v236, 3
  %v238 = vpop.permute.xlu0 %237
  %v239 = vlaneseq
  %v240 = vshrl.u32 %v239, 7
  %v241 = vsub.s32 7, %v240
  %v242 = vrot.slane %v17, %v241
  %v243 = vmul.f32 %v238, %v242
  %244 = vrot.lane.b32.xlu0 %v236, 2
  %v245 = vpop.permute.xlu0 %244
  %v246 = vlaneseq
  %v247 = vshrl.u32 %v246, 7
  %v248 = vsub.s32 0, %v247
  %v249 = vrot.slane %v18, %v248
  %v250 = vmul.f32 %v245, %v249
  %251 = vrot.lane.b32.xlu0 %v236, 1
  %v252 = vpop.permute.xlu0 %251
  %v253 = vmul.f32 %v252, %v128
  %254 = vrot.lane.b32.xlu0 %v236, 127
  %v255 = vpop.permute.xlu0 %254
  %v256 = vmul.f32 %v255, %v135
  %257 = vrot.lane.b32.xlu0 %v236, 126
  %v258 = vpop.permute.xlu0 %257
  %v259 = vlaneseq
  %v260 = vshrl.u32 %v259, 7
  %v261 = vsub.s32 4, %v260
  %v262 = vrot.slane %v18, %v261
  %v263 = vmul.f32 %v258, %v262
  %264 = vrot.lane.b32.xlu0 %v236, 125
  %v265 = vpop.permute.xlu0 %264
  %v266 = vlaneseq
  %v267 = vshrl.u32 %v266, 7
  %v268 = vsub.s32 5, %v267
  %v269 = vrot.slane %v18, %v268
  %v270 = vmul.f32 %v265, %v269
  %271 = vrot.lane.b32.xlu0 %v243, 24
  %v272 = vpop.permute.xlu0 %271
  %273 = vset.pattern.permute.xlu0 36
  %274 = vperm.xlu0 %273, %v20
  %v275 = vpop.permute.xlu0 %274
  %v277 = vmul.f32 %v275, %v272
  %278 = vrot.lane.b32.xlu0 %v250, 24
  %v279 = vpop.permute.xlu0 %278
  %280 = vset.pattern.permute.xlu0 37
  %281 = vperm.xlu0 %280, %v20
  %v282 = vpop.permute.xlu0 %281
  %v284 = vmul.f32 %v282, %v279
  %v285 = vadd.f32 %v277, %v284
  %286 = vrot.lane.b32.xlu0 %v253, 24
  %v287 = vpop.permute.xlu0 %286
  %288 = vset.pattern.permute.xlu0 38
  %289 = vperm.xlu0 %288, %v20
  %v290 = vpop.permute.xlu0 %289
  %v292 = vmul.f32 %v290, %v287
  %v293 = vadd.f32 %v285, %v292
  %294 = vrot.lane.b32.xlu0 %v236, 24
  %v295 = vpop.permute.xlu0 %294
  %296 = vset.pattern.permute.xlu0 39
  %297 = vperm.xlu0 %296, %v20
  %v298 = vpop.permute.xlu0 %297
  %v300 = vmul.f32 %v298, %v295
  %v301 = vadd.f32 %v293, %v300
  %302 = vrot.lane.b32.xlu0 %v256, 24
  %v303 = vpop.permute.xlu0 %302
  %304 = vset.pattern.permute.xlu0 40
  %305 = vperm.xlu0 %304, %v20
  %v306 = vpop.permute.xlu0 %305
  %v308 = vmul.f32 %v306, %v303
  %v309 = vadd.f32 %v301, %v308
  %310 = vrot.lane.b32.xlu0 %v263, 24
  %v311 = vpop.permute.xlu0 %310
  %312 = vset.pattern.permute.xlu0 41
  %313 = vperm.xlu0 %312, %v20
  %v314 = vpop.permute.xlu0 %313
  %v316 = vmul.f32 %v314, %v311
  %v317 = vadd.f32 %v309, %v316
  %318 = vrot.lane.b32.xlu0 %v270, 24
  %v319 = vpop.permute.xlu0 %318
  %320 = vset.pattern.permute.xlu0 42
  %321 = vperm.xlu0 %320, %v20
  %v322 = vpop.permute.xlu0 %321
  %v324 = vmul.f32 %v322, %v319
  %v325 = vadd.f32 %v317, %v324
  %v326 = vlaneseq
  %v327 = vshrl.u32 %v326, 7
  %v328 = vsub.s32 0, %v327
  %v329 = vrot.slane %v17, %v328
  %v330 = vmul.f32 %v325, %v329
  %331 = vrot.lane.b32.xlu0 %v243, 16
  %v332 = vpop.permute.xlu0 %331
  %333 = vset.pattern.permute.xlu0 43
  %334 = vperm.xlu0 %333, %v20
  %v335 = vpop.permute.xlu0 %334
  %v337 = vmul.f32 %v335, %v332
  %338 = vrot.lane.b32.xlu0 %v250, 16
  %v339 = vpop.permute.xlu0 %338
  %340 = vset.pattern.permute.xlu0 44
  %341 = vperm.xlu0 %340, %v20
  %v342 = vpop.permute.xlu0 %341
  %v344 = vmul.f32 %v342, %v339
  %v345 = vadd.f32 %v337, %v344
  %346 = vrot.lane.b32.xlu0 %v253, 16
  %v347 = vpop.permute.xlu0 %346
  %348 = vset.pattern.permute.xlu0 45
  %349 = vperm.xlu0 %348, %v20
  %v350 = vpop.permute.xlu0 %349
  %v352 = vmul.f32 %v350, %v347
  %v353 = vadd.f32 %v345, %v352
  %354 = vrot.lane.b32.xlu0 %v236, 16
  %v355 = vpop.permute.xlu0 %354
  %356 = vset.pattern.permute.xlu0 46
  %357 = vperm.xlu0 %356, %v20
  %v358 = vpop.permute.xlu0 %357
  %v360 = vmul.f32 %v358, %v355
  %v361 = vadd.f32 %v353, %v360
  %362 = vrot.lane.b32.xlu0 %v256, 16
  %v363 = vpop.permute.xlu0 %362
  %364 = vset.pattern.permute.xlu0 47
  %365 = vperm.xlu0 %364, %v20
  %v366 = vpop.permute.xlu0 %365
  %v368 = vmul.f32 %v366, %v363
  %v369 = vadd.f32 %v361, %v368
  %370 = vrot.lane.b32.xlu0 %v263, 16
  %v371 = vpop.permute.xlu0 %370
  %372 = vset.pattern.permute.xlu0 48
  %373 = vperm.xlu0 %372, %v20
  %v374 = vpop.permute.xlu0 %373
  %v376 = vmul.f32 %v374, %v371
  %v377 = vadd.f32 %v369, %v376
  %378 = vrot.lane.b32.xlu0 %v270, 16
  %v379 = vpop.permute.xlu0 %378
  %380 = vset.pattern.permute.xlu0 49
  %381 = vperm.xlu0 %380, %v20
  %v382 = vpop.permute.xlu0 %381
  %v384 = vmul.f32 %v382, %v379
  %v385 = vadd.f32 %v377, %v384
  %v386 = vlaneseq
  %v387 = vshrl.u32 %v386, 7
  %v388 = vsub.s32 1, %v387
  %v389 = vrot.slane %v17, %v388
  %v390 = vmul.f32 %v385, %v389
  %391 = vrot.lane.b32.xlu0 %v243, 8
  %v392 = vpop.permute.xlu0 %391
  %393 = vset.pattern.permute.xlu0 50
  %394 = vperm.xlu0 %393, %v20
  %v395 = vpop.permute.xlu0 %394
  %v397 = vmul.f32 %v395, %v392
  %398 = vrot.lane.b32.xlu0 %v250, 8
  %v399 = vpop.permute.xlu0 %398
  %400 = vset.pattern.permute.xlu0 51
  %401 = vperm.xlu0 %400, %v20
  %v402 = vpop.permute.xlu0 %401
  %v404 = vmul.f32 %v402, %v399
  %v405 = vadd.f32 %v397, %v404
  %406 = vrot.lane.b32.xlu0 %v253, 8
  %v407 = vpop.permute.xlu0 %406
  %408 = vset.pattern.permute.xlu0 52
  %409 = vperm.xlu0 %408, %v20
  %v410 = vpop.permute.xlu0 %409
  %v412 = vmul.f32 %v410, %v407
  %v413 = vadd.f32 %v405, %v412
  %414 = vrot.lane.b32.xlu0 %v236, 8
  %v415 = vpop.permute.xlu0 %414
  %416 = vset.pattern.permute.xlu0 53
  %417 = vperm.xlu0 %416, %v20
  %v418 = vpop.permute.xlu0 %417
  %v420 = vmul.f32 %v418, %v415
  %v421 = vadd.f32 %v413, %v420
  %422 = vrot.lane.b32.xlu0 %v256, 8
  %v423 = vpop.permute.xlu0 %422
  %424 = vset.pattern.permute.xlu0 54
  %425 = vperm.xlu0 %424, %v20
  %v426 = vpop.permute.xlu0 %425
  %v428 = vmul.f32 %v426, %v423
  %v429 = vadd.f32 %v421, %v428
  %430 = vrot.lane.b32.xlu0 %v263, 8
  %v431 = vpop.permute.xlu0 %430
  %432 = vset.pattern.permute.xlu0 55
  %433 = vperm.xlu0 %432, %v20
  %v434 = vpop.permute.xlu0 %433
  %v436 = vmul.f32 %v434, %v431
  %v437 = vadd.f32 %v429, %v436
  %438 = vrot.lane.b32.xlu0 %v270, 8
  %v439 = vpop.permute.xlu0 %438
  %440 = vset.pattern.permute.xlu0 56
  %441 = vperm.xlu0 %440, %v20
  %v442 = vpop.permute.xlu0 %441
  %v444 = vmul.f32 %v442, %v439
  %v445 = vadd.f32 %v437, %v444
  %v446 = vmul.f32 %v445, %v26
  %447 = vset.pattern.permute.xlu0 57
  %448 = vperm.xlu0 %447, %v20
  %v449 = vpop.permute.xlu0 %448
  %v451 = vmul.f32 %v449, %v243
  %452 = vset.pattern.permute.xlu0 58
  %453 = vperm.xlu0 %452, %v20
  %v454 = vpop.permute.xlu0 %453
  %v456 = vmul.f32 %v454, %v250
  %v457 = vadd.f32 %v451, %v456
  %458 = vset.pattern.permute.xlu0 59
  %459 = vperm.xlu0 %458, %v20
  %v460 = vpop.permute.xlu0 %459
  %v462 = vmul.f32 %v460, %v253
  %v463 = vadd.f32 %v457, %v462
  %464 = vset.pattern.permute.xlu0 60
  %465 = vperm.xlu0 %464, %v20
  %v466 = vpop.permute.xlu0 %465
  %v468 = vmul.f32 %v466, %v236
  %v469 = vadd.f32 %v463, %v468
  %470 = vset.pattern.permute.xlu0 61
  %471 = vperm.xlu0 %470, %v20
  %v472 = vpop.permute.xlu0 %471
  %v474 = vmul.f32 %v472, %v256
  %v475 = vadd.f32 %v469, %v474
  %476 = vset.pattern.permute.xlu0 62
  %477 = vperm.xlu0 %476, %v20
  %v478 = vpop.permute.xlu0 %477
  %v480 = vmul.f32 %v478, %v263
  %v481 = vadd.f32 %v475, %v480
  %482 = vset.pattern.permute.xlu0 63
  %483 = vperm.xlu0 %482, %v20
  %v484 = vpop.permute.xlu0 %483
  %v486 = vmul.f32 %v484, %v270
  %v487 = vadd.f32 %v481, %v486
  %488 = vrot.lane.b32.xlu0 %v243, 120
  %v489 = vpop.permute.xlu0 %488
  %490 = vset.pattern.permute.xlu0 64
  %491 = vperm.xlu0 %490, %v20
  %v492 = vpop.permute.xlu0 %491
  %v494 = vmul.f32 %v492, %v489
  %495 = vrot.lane.b32.xlu0 %v250, 120
  %v496 = vpop.permute.xlu0 %495
  %497 = vset.pattern.permute.xlu0 65
  %498 = vperm.xlu0 %497, %v20
  %v499 = vpop.permute.xlu0 %498
  %v501 = vmul.f32 %v499, %v496
  %v502 = vadd.f32 %v494, %v501
  %503 = vrot.lane.b32.xlu0 %v253, 120
  %v504 = vpop.permute.xlu0 %503
  %505 = vset.pattern.permute.xlu0 66
  %506 = vperm.xlu0 %505, %v20
  %v507 = vpop.permute.xlu0 %506
  %v509 = vmul.f32 %v507, %v504
  %v510 = vadd.f32 %v502, %v509
  %511 = vrot.lane.b32.xlu0 %v236, 120
  %v512 = vpop.permute.xlu0 %511
  %513 = vset.pattern.permute.xlu0 67
  %514 = vperm.xlu0 %513, %v20
  %v515 = vpop.permute.xlu0 %514
  %v517 = vmul.f32 %v515, %v512
  %v518 = vadd.f32 %v510, %v517
  %519 = vrot.lane.b32.xlu0 %v256, 120
  %v520 = vpop.permute.xlu0 %519
  %521 = vset.pattern.permute.xlu0 68
  %522 = vperm.xlu0 %521, %v20
  %v523 = vpop.permute.xlu0 %522
  %v525 = vmul.f32 %v523, %v520
  %v526 = vadd.f32 %v518, %v525
  %527 = vrot.lane.b32.xlu0 %v263, 120
  %v528 = vpop.permute.xlu0 %527
  %529 = vset.pattern.permute.xlu0 69
  %530 = vperm.xlu0 %529, %v20
  %v531 = vpop.permute.xlu0 %530
  %v533 = vmul.f32 %v531, %v528
  %v534 = vadd.f32 %v526, %v533
  %535 = vrot.lane.b32.xlu0 %v270, 120
  %v536 = vpop.permute.xlu0 %535
  %537 = vset.pattern.permute.xlu0 70
  %538 = vperm.xlu0 %537, %v20
  %v539 = vpop.permute.xlu0 %538
  %v541 = vmul.f32 %v539, %v536
  %v542 = vadd.f32 %v534, %v541
  %v543 = vmul.f32 %v542, %v33
  %544 = vrot.lane.b32.xlu0 %v243, 112
  %v545 = vpop.permute.xlu0 %544
  %546 = vset.pattern.permute.xlu0 71
  %547 = vperm.xlu0 %546, %v20
  %v548 = vpop.permute.xlu0 %547
  %v550 = vmul.f32 %v548, %v545
  %551 = vrot.lane.b32.xlu0 %v250, 112
  %v552 = vpop.permute.xlu0 %551
  %553 = vset.pattern.permute.xlu0 72
  %554 = vperm.xlu0 %553, %v20
  %v555 = vpop.permute.xlu0 %554
  %v557 = vmul.f32 %v555, %v552
  %v558 = vadd.f32 %v550, %v557
  %559 = vrot.lane.b32.xlu0 %v253, 112
  %v560 = vpop.permute.xlu0 %559
  %561 = vset.pattern.permute.xlu0 73
  %562 = vperm.xlu0 %561, %v20
  %v563 = vpop.permute.xlu0 %562
  %v565 = vmul.f32 %v563, %v560
  %v566 = vadd.f32 %v558, %v565
  %567 = vrot.lane.b32.xlu0 %v236, 112
  %v568 = vpop.permute.xlu0 %567
  %569 = vset.pattern.permute.xlu0 74
  %570 = vperm.xlu0 %569, %v20
  %v571 = vpop.permute.xlu0 %570
  %v573 = vmul.f32 %v571, %v568
  %v574 = vadd.f32 %v566, %v573
  %575 = vrot.lane.b32.xlu0 %v256, 112
  %v576 = vpop.permute.xlu0 %575
  %577 = vset.pattern.permute.xlu0 75
  %578 = vperm.xlu0 %577, %v20
  %v579 = vpop.permute.xlu0 %578
  %v581 = vmul.f32 %v579, %v576
  %v582 = vadd.f32 %v574, %v581
  %583 = vrot.lane.b32.xlu0 %v263, 112
  %v584 = vpop.permute.xlu0 %583
  %585 = vset.pattern.permute.xlu0 76
  %586 = vperm.xlu0 %585, %v20
  %v587 = vpop.permute.xlu0 %586
  %v589 = vmul.f32 %v587, %v584
  %v590 = vadd.f32 %v582, %v589
  %591 = vrot.lane.b32.xlu0 %v270, 112
  %v592 = vpop.permute.xlu0 %591
  %593 = vset.pattern.permute.xlu0 77
  %594 = vperm.xlu0 %593, %v20
  %v595 = vpop.permute.xlu0 %594
  %v597 = vmul.f32 %v595, %v592
  %v598 = vadd.f32 %v590, %v597
  %v599 = vlaneseq
  %v600 = vshrl.u32 %v599, 7
  %v601 = vsub.s32 5, %v600
  %v602 = vrot.slane %v17, %v601
  %v603 = vmul.f32 %v598, %v602
  %604 = vrot.lane.b32.xlu0 %v243, 104
  %v605 = vpop.permute.xlu0 %604
  %606 = vset.pattern.permute.xlu0 78
  %607 = vperm.xlu0 %606, %v20
  %v608 = vpop.permute.xlu0 %607
  %v610 = vmul.f32 %v608, %v605
  %611 = vrot.lane.b32.xlu0 %v250, 104
  %v612 = vpop.permute.xlu0 %611
  %613 = vset.pattern.permute.xlu0 79
  %614 = vperm.xlu0 %613, %v20
  %v615 = vpop.permute.xlu0 %614
  %v617 = vmul.f32 %v615, %v612
  %v618 = vadd.f32 %v610, %v617
  %619 = vrot.lane.b32.xlu0 %v253, 104
  %v620 = vpop.permute.xlu0 %619
  %621 = vset.pattern.permute.xlu0 80
  %622 = vperm.xlu0 %621, %v20
  %v623 = vpop.permute.xlu0 %622
  %v625 = vmul.f32 %v623, %v620
  %v626 = vadd.f32 %v618, %v625
  %627 = vrot.lane.b32.xlu0 %v236, 104
  %v628 = vpop.permute.xlu0 %627
  %629 = vset.pattern.permute.xlu0 81
  %630 = vperm.xlu0 %629, %v20
  %v631 = vpop.permute.xlu0 %630
  %v633 = vmul.f32 %v631, %v628
  %v634 = vadd.f32 %v626, %v633
  %635 = vrot.lane.b32.xlu0 %v256, 104
  %v636 = vpop.permute.xlu0 %635
  %637 = vset.pattern.permute.xlu0 82
  %638 = vperm.xlu0 %637, %v20
  %v639 = vpop.permute.xlu0 %638
  %v641 = vmul.f32 %v639, %v636
  %v642 = vadd.f32 %v634, %v641
  %643 = vrot.lane.b32.xlu0 %v263, 104
  %v644 = vpop.permute.xlu0 %643
  %645 = vset.pattern.permute.xlu0 83
  %646 = vperm.xlu0 %645, %v20
  %v647 = vpop.permute.xlu0 %646
  %v649 = vmul.f32 %v647, %v644
  %v650 = vadd.f32 %v642, %v649
  %651 = vrot.lane.b32.xlu0 %v270, 104
  %v652 = vpop.permute.xlu0 %651
  %653 = vset.pattern.permute.xlu0 84
  %654 = vperm.xlu0 %653, %v20
  %v655 = vpop.permute.xlu0 %654
  %v657 = vmul.f32 %v655, %v652
  %v658 = vadd.f32 %v650, %v657
  %v659 = vlaneseq
  %v660 = vshrl.u32 %v659, 7
  %v661 = vsub.s32 6, %v660
  %v662 = vrot.slane %v17, %v661
  %v663 = vmul.f32 %v658, %v662
  %v664 = vadd.f32 %v330, %v390
  %v665 = vadd.f32 %v446, %v487
  %v666 = vadd.f32 %v543, %v603
  %v667 = vadd.f32 %v664, %v665
  %v668 = vadd.f32 %v666, %v663
  %v669 = vadd.f32 %v667, %v668
  %670 = vset.pattern.permute.xlu0 111
  %671 = vperm.xlu0 %670, %v20
  %v672 = vpop.permute.xlu0 %671
  %v674 = vadd.f32 %v672, %v669
  %v675 = vmax.f32 %v674, 0.0
  %676 = vrot.lane.b32.xlu0 %v20, 43
  %v677 = vpop.permute.xlu0 %676
  %vm678 = vcmask 64512
  %v679 = vsel %vm678, %v677, 0
  %681 = vmatprep.subr.mxu0 0.0
  %682 = vmatpush1.msra.mxu0 0.0
  %683 = vmatprep.subr.mxu0 0.0
  %684 = vmatpush1.msra.mxu0 0.0
  %685 = vmatprep.subr.mxu0 0.0
  %686 = vmatpush1.msra.mxu0 0.0
  %687 = vmatprep.subr.mxu0 0.0
  %688 = vmatpush1.msra.mxu0 0.0
  %689 = vmatprep.subr.mxu0 0.0
  %690 = vmatpush1.msra.mxu0 0.0
  %691 = vmatprep.subr.mxu0 0.0
  %692 = vmatpush1.msra.mxu0 0.0
  %693 = vmatprep.subr.mxu0 0.0
  %694 = vmatpush1.msra.mxu0 0.0
  %695 = vmatprep.subr.mxu0 0.0
  %696 = vmatpush1.msra.mxu0 0.0
  %697 = vmatprep.subr.mxu0 0.0
  %698 = vmatpush1.msra.mxu0 0.0
  %699 = vmatprep.subr.mxu0 0.0
  %700 = vmatpush1.msra.mxu0 0.0
  %701 = vmatprep.subr.mxu0 0.0
  %702 = vmatpush1.msra.mxu0 0.0
  %703 = vmatprep.subr.mxu0 0.0
  %704 = vmatpush1.msra.mxu0 0.0
  %705 = vmatprep.subr.mxu0 0.0
  %706 = vmatpush1.msra.mxu0 0.0
  %707 = vmatprep.subr.mxu0 0.0
  %708 = vmatpush1.msra.mxu0 0.0
  %709 = vmatprep.subr.mxu0 0.0
  %710 = vmatpush1.msra.mxu0 0.0
  %711 = vmatprep.subr.mxu0 0.0
  %712 = vmatpush1.msra.mxu0 %v675
  %713 = vmatprep.subr.mxu0 0.0
  %714 = vmatpush2.msra.mxu0 0.0
  %715 = vmatprep.subr.mxu0 0.0
  %716 = vmatpush2.msra.mxu0 0.0
  %717 = vmatprep.subr.mxu0 0.0
  %718 = vmatpush2.msra.mxu0 0.0
  %719 = vmatprep.subr.mxu0 0.0
  %720 = vmatpush2.msra.mxu0 0.0
  %721 = vmatprep.subr.mxu0 0.0
  %722 = vmatpush2.msra.mxu0 0.0
  %723 = vmatprep.subr.mxu0 0.0
  %724 = vmatpush2.msra.mxu0 0.0
  %725 = vmatprep.subr.mxu0 0.0
  %726 = vmatpush2.msra.mxu0 0.0
  %727 = vmatprep.subr.mxu0 0.0
  %728 = vmatpush2.msra.mxu0 0.0
  %729 = vmatprep.subr.mxu0 0.0
  %730 = vmatpush2.msra.mxu0 0.0
  %731 = vmatprep.subr.mxu0 0.0
  %732 = vmatpush2.msra.mxu0 0.0
  %733 = vmatprep.subr.mxu0 0.0
  %734 = vmatpush2.msra.mxu0 0.0
  %735 = vmatprep.subr.mxu0 0.0
  %736 = vmatpush2.msra.mxu0 0.0
  %737 = vmatprep.subr.mxu0 0.0
  %738 = vmatpush2.msra.mxu0 0.0
  %739 = vmatprep.subr.mxu0 0.0
  %740 = vmatpush2.msra.mxu0 0.0
  %741 = vmatprep.subr.mxu0 0.0
  %742 = vmatpush2.msra.mxu0 0.0
  %743 = vmatprep.subr.mxu0 0.0
  %744 = vmatpush2.msra.mxu0 0.0
  %745 = vmatprep.mubr.f32.mxu0 0.0
  %746 = vmatmul.mubr.f32.gmra.mxu0 %v679
  %v747 = vpop.f32.mrf.mxu0
  %v748 = vadd.f32 0.0, %v747
  %v749 = vpop.f32.mrf.mxu0
  %750 = vdwg.mxu0
  %751 = vset.pattern.permute.xlu0 112
  %752 = vperm.xlu0 %751, %v20
  %v753 = vpop.permute.xlu0 %752
  %v755 = vadd.f32 %v753, %v748
  %v756 = vmax.f32 %v755, 0.0
  %757 = vrot.lane.b32.xlu0 %v20, 35
  %v758 = vpop.permute.xlu0 %757
  %vm759 = vcmask 130048
  %v760 = vsel %vm759, %v758, 0
  %762 = vmatprep.subr.mxu0 0.0
  %763 = vmatpush1.msra.mxu0 0.0
  %764 = vmatprep.subr.mxu0 0.0
  %765 = vmatpush1.msra.mxu0 0.0
  %766 = vmatprep.subr.mxu0 0.0
  %767 = vmatpush1.msra.mxu0 0.0
  %768 = vmatprep.subr.mxu0 0.0
  %769 = vmatpush1.msra.mxu0 0.0
  %770 = vmatprep.subr.mxu0 0.0
  %771 = vmatpush1.msra.mxu0 0.0
  %772 = vmatprep.subr.mxu0 0.0
  %773 = vmatpush1.msra.mxu0 0.0
  %774 = vmatprep.subr.mxu0 0.0
  %775 = vmatpush1.msra.mxu0 0.0
  %776 = vmatprep.subr.mxu0 0.0
  %777 = vmatpush1.msra.mxu0 0.0
  %778 = vmatprep.subr.mxu0 0.0
  %779 = vmatpush1.msra.mxu0 0.0
  %780 = vmatprep.subr.mxu0 0.0
  %781 = vmatpush1.msra.mxu0 0.0
  %782 = vmatprep.subr.mxu0 0.0
  %783 = vmatpush1.msra.mxu0 0.0
  %784 = vmatprep.subr.mxu0 0.0
  %785 = vmatpush1.msra.mxu0 0.0
  %786 = vmatprep.subr.mxu0 0.0
  %787 = vmatpush1.msra.mxu0 0.0
  %788 = vmatprep.subr.mxu0 0.0
  %789 = vmatpush1.msra.mxu0 0.0
  %790 = vmatprep.subr.mxu0 0.0
  %791 = vmatpush1.msra.mxu0 %v756
  %792 = vmatprep.subr.mxu0 0.0
  %793 = vmatpush1.msra.mxu0 %v217
  %794 = vmatprep.subr.mxu0 0.0
  %795 = vmatpush2.msra.mxu0 0.0
  %796 = vmatprep.subr.mxu0 0.0
  %797 = vmatpush2.msra.mxu0 0.0
  %798 = vmatprep.subr.mxu0 0.0
  %799 = vmatpush2.msra.mxu0 0.0
  %800 = vmatprep.subr.mxu0 0.0
  %801 = vmatpush2.msra.mxu0 0.0
  %802 = vmatprep.subr.mxu0 0.0
  %803 = vmatpush2.msra.mxu0 0.0
  %804 = vmatprep.subr.mxu0 0.0
  %805 = vmatpush2.msra.mxu0 0.0
  %806 = vmatprep.subr.mxu0 0.0
  %807 = vmatpush2.msra.mxu0 0.0
  %808 = vmatprep.subr.mxu0 0.0
  %809 = vmatpush2.msra.mxu0 0.0
  %810 = vmatprep.subr.mxu0 0.0
  %811 = vmatpush2.msra.mxu0 0.0
  %812 = vmatprep.subr.mxu0 0.0
  %813 = vmatpush2.msra.mxu0 0.0
  %814 = vmatprep.subr.mxu0 0.0
  %815 = vmatpush2.msra.mxu0 0.0
  %816 = vmatprep.subr.mxu0 0.0
  %817 = vmatpush2.msra.mxu0 0.0
  %818 = vmatprep.subr.mxu0 0.0
  %819 = vmatpush2.msra.mxu0 0.0
  %820 = vmatprep.subr.mxu0 0.0
  %821 = vmatpush2.msra.mxu0 0.0
  %822 = vmatprep.subr.mxu0 0.0
  %823 = vmatpush2.msra.mxu0 0.0
  %824 = vmatprep.subr.mxu0 0.0
  %825 = vmatpush2.msra.mxu0 0.0
  %826 = vmatprep.mubr.f32.mxu0 0.0
  %827 = vmatmul.mubr.f32.gmra.mxu0 %v760
  %v828 = vpop.f32.mrf.mxu0
  %v829 = vadd.f32 0.0, %v828
  %v830 = vpop.f32.mrf.mxu0
  %831 = vdwg.mxu0
  %832 = vset.pattern.permute.xlu0 113
  %833 = vperm.xlu0 %832, %v20
  %v834 = vpop.permute.xlu0 %833
  %v836 = vadd.f32 %v834, %v829
  %v837 = vmax.f32 %v836, 0.0
  %v838 = vld [vmem:[%s3] sm:$0xff]
  %839 = vrot.lane.b32.xlu0 %v837, 8
  %v840 = vpop.permute.xlu0 %839
  %v841 = vmul.f32 %v840, %v26
  %842 = vrot.lane.b32.xlu0 %v837, 120
  %v843 = vpop.permute.xlu0 %842
  %v844 = vmul.f32 %v843, %v33
  %v846 = vsel %vm139, %v838, 0
  %848 = vmatprep.subr.mxu0 0.0
  %849 = vmatpush1.msra.mxu0 0.0
  %850 = vmatprep.subr.mxu0 0.0
  %851 = vmatpush1.msra.mxu0 0.0
  %852 = vmatprep.subr.mxu0 0.0
  %853 = vmatpush1.msra.mxu0 0.0
  %854 = vmatprep.subr.mxu0 0.0
  %855 = vmatpush1.msra.mxu0 0.0
  %856 = vmatprep.subr.mxu0 0.0
  %857 = vmatpush1.msra.mxu0 0.0
  %858 = vmatprep.subr.mxu0 0.0
  %859 = vmatpush1.msra.mxu0 0.0
  %860 = vmatprep.subr.mxu0 0.0
  %861 = vmatpush1.msra.mxu0 0.0
  %862 = vmatprep.subr.mxu0 0.0
  %863 = vmatpush1.msra.mxu0 0.0
  %864 = vmatprep.subr.mxu0 0.0
  %865 = vmatpush1.msra.mxu0 0.0
  %866 = vmatprep.subr.mxu0 0.0
  %867 = vmatpush1.msra.mxu0 0.0
  %868 = vmatprep.subr.mxu0 0.0
  %869 = vmatpush1.msra.mxu0 0.0
  %870 = vmatprep.subr.mxu0 0.0
  %871 = vmatpush1.msra.mxu0 0.0
  %872 = vmatprep.subr.mxu0 0.0
  %873 = vmatpush1.msra.mxu0 0.0
  %874 = vmatprep.subr.mxu0 0.0
  %875 = vmatpush1.msra.mxu0 %v844
  %876 = vmatprep.subr.mxu0 0.0
  %877 = vmatpush1.msra.mxu0 %v837
  %878 = vmatprep.subr.mxu0 0.0
  %879 = vmatpush1.msra.mxu0 %v841
  %880 = vmatprep.subr.mxu0 0.0
  %881 = vmatpush2.msra.mxu0 0.0
  %882 = vmatprep.subr.mxu0 0.0
  %883 = vmatpush2.msra.mxu0 0.0
  %884 = vmatprep.subr.mxu0 0.0
  %885 = vmatpush2.msra.mxu0 0.0
  %886 = vmatprep.subr.mxu0 0.0
  %887 = vmatpush2.msra.mxu0 0.0
  %888 = vmatprep.subr.mxu0 0.0
  %889 = vmatpush2.msra.mxu0 0.0
  %890 = vmatprep.subr.mxu0 0.0
  %891 = vmatpush2.msra.mxu0 0.0
  %892 = vmatprep.subr.mxu0 0.0
  %893 = vmatpush2.msra.mxu0 0.0
  %894 = vmatprep.subr.mxu0 0.0
  %895 = vmatpush2.msra.mxu0 0.0
  %896 = vmatprep.subr.mxu0 0.0
  %897 = vmatpush2.msra.mxu0 0.0
  %898 = vmatprep.subr.mxu0 0.0
  %899 = vmatpush2.msra.mxu0 0.0
  %900 = vmatprep.subr.mxu0 0.0
  %901 = vmatpush2.msra.mxu0 0.0
  %902 = vmatprep.subr.mxu0 0.0
  %903 = vmatpush2.msra.mxu0 0.0
  %904 = vmatprep.subr.mxu0 0.0
  %905 = vmatpush2.msra.mxu0 0.0
  %906 = vmatprep.subr.mxu0 0.0
  %907 = vmatpush2.msra.mxu0 0.0
  %908 = vmatprep.subr.mxu0 0.0
  %909 = vmatpush2.msra.mxu0 0.0
  %910 = vmatprep.subr.mxu0 0.0
  %911 = vmatpush2.msra.mxu0 0.0
  %912 = vmatprep.mubr.f32.mxu0 0.0
  %913 = vmatmul.mubr.f32.gmra.mxu0 %v846
  %v914 = vpop.f32.mrf.mxu0
  %v915 = vadd.f32 0.0, %v914
  %v916 = vpop.f32.mrf.mxu0
  %917 = vdwg.mxu0
  %918 = vset.pattern.permute.xlu0 121
  %919 = vperm.xlu0 %918, %v838
  %v920 = vpop.permute.xlu0 %919
  %v922 = vadd.f32 %v920, %v915
  %v923 = vmax.f32 %v922, 0.0
  %924 = vrot.lane.b32.xlu0 %v923, 1
  %v925 = vpop.permute.xlu0 %924
  %v926 = vmul.f32 %v925, %v128
  %927 = vrot.lane.b32.xlu0 %v923, 127
  %v928 = vpop.permute.xlu0 %927
  %v929 = vmul.f32 %v928, %v135
  %930 = vrot.lane.b32.xlu0 %v838, 104
  %v931 = vpop.permute.xlu0 %930
  %v932 = vsel %vm139, %v931, 0
  %934 = vmatprep.subr.mxu0 0.0
  %935 = vmatpush1.msra.mxu0 0.0
  %936 = vmatprep.subr.mxu0 0.0
  %937 = vmatpush1.msra.mxu0 0.0
  %938 = vmatprep.subr.mxu0 0.0
  %939 = vmatpush1.msra.mxu0 0.0
  %940 = vmatprep.subr.mxu0 0.0
  %941 = vmatpush1.msra.mxu0 0.0
  %942 = vmatprep.subr.mxu0 0.0
  %943 = vmatpush1.msra.mxu0 0.0
  %944 = vmatprep.subr.mxu0 0.0
  %945 = vmatpush1.msra.mxu0 0.0
  %946 = vmatprep.subr.mxu0 0.0
  %947 = vmatpush1.msra.mxu0 0.0
  %948 = vmatprep.subr.mxu0 0.0
  %949 = vmatpush1.msra.mxu0 0.0
  %950 = vmatprep.subr.mxu0 0.0
  %951 = vmatpush1.msra.mxu0 0.0
  %952 = vmatprep.subr.mxu0 0.0
  %953 = vmatpush1.msra.mxu0 0.0
  %954 = vmatprep.subr.mxu0 0.0
  %955 = vmatpush1.msra.mxu0 0.0
  %956 = vmatprep.subr.mxu0 0.0
  %957 = vmatpush1.msra.mxu0 0.0
  %958 = vmatprep.subr.mxu0 0.0
  %959 = vmatpush1.msra.mxu0 0.0
  %960 = vmatprep.subr.mxu0 0.0
  %961 = vmatpush1.msra.mxu0 %v929
  %962 = vmatprep.subr.mxu0 0.0
  %963 = vmatpush1.msra.mxu0 %v923
  %964 = vmatprep.subr.mxu0 0.0
  %965 = vmatpush1.msra.mxu0 %v926
  %966 = vmatprep.subr.mxu0 0.0
  %967 = vmatpush2.msra.mxu0 0.0
  %968 = vmatprep.subr.mxu0 0.0
  %969 = vmatpush2.msra.mxu0 0.0
  %970 = vmatprep.subr.mxu0 0.0
  %971 = vmatpush2.msra.mxu0 0.0
  %972 = vmatprep.subr.mxu0 0.0
  %973 = vmatpush2.msra.mxu0 0.0
  %974 = vmatprep.subr.mxu0 0.0
  %975 = vmatpush2.msra.mxu0 0.0
  %976 = vmatprep.subr.mxu0 0.0
  %977 = vmatpush2.msra.mxu0 0.0
  %978 = vmatprep.subr.mxu0 0.0
  %979 = vmatpush2.msra.mxu0 0.0
  %980 = vmatprep.subr.mxu0 0.0
  %981 = vmatpush2.msra.mxu0 0.0
  %982 = vmatprep.subr.mxu0 0.0
  %983 = vmatpush2.msra.mxu0 0.0
  %984 = vmatprep.subr.mxu0 0.0
  %985 = vmatpush2.msra.mxu0 0.0
  %986 = vmatprep.subr.mxu0 0.0
  %987 = vmatpush2.msra.mxu0 0.0
  %988 = vmatprep.subr.mxu0 0.0
  %989 = vmatpush2.msra.mxu0 0.0
  %990 = vmatprep.subr.mxu0 0.0
  %991 = vmatpush2.msra.mxu0 0.0
  %992 = vmatprep.subr.mxu0 0.0
  %993 = vmatpush2.msra.mxu0 0.0
  %994 = vmatprep.subr.mxu0 0.0
  %995 = vmatpush2.msra.mxu0 0.0
  %996 = vmatprep.subr.mxu0 0.0
  %997 = vmatpush2.msra.mxu0 0.0
  %998 = vmatprep.mubr.f32.mxu0 0.0
  %999 = vmatmul.mubr.f32.gmra.mxu0 %v932
  %v1000 = vpop.f32.mrf.mxu0
  %v1001 = vadd.f32 0.0, %v1000
  %v1002 = vpop.f32.mrf.mxu0
  %1003 = vdwg.mxu0
  %1004 = vset.pattern.permute.xlu0 122
  %1005 = vperm.xlu0 %1004, %v838
  %v1006 = vpop.permute.xlu0 %1005
  %v1008 = vadd.f32 %v1006, %v1001
  %v1009 = vmax.f32 %v1008, 0.0
  %1010 = vrot.lane.b32.xlu0 %v837, 3
  %v1011 = vpop.permute.xlu0 %1010
  %v1012 = vmul.f32 %v1011, %v242
  %1013 = vrot.lane.b32.xlu0 %v837, 2
  %v1014 = vpop.permute.xlu0 %1013
  %v1015 = vmul.f32 %v1014, %v249
  %1016 = vrot.lane.b32.xlu0 %v837, 1
  %v1017 = vpop.permute.xlu0 %1016
  %v1018 = vmul.f32 %v1017, %v128
  %1019 = vrot.lane.b32.xlu0 %v837, 127
  %v1020 = vpop.permute.xlu0 %1019
  %v1021 = vmul.f32 %v1020, %v135
  %1022 = vrot.lane.b32.xlu0 %v837, 126
  %v1023 = vpop.permute.xlu0 %1022
  %v1024 = vmul.f32 %v1023, %v262
  %1025 = vrot.lane.b32.xlu0 %v837, 125
  %v1026 = vpop.permute.xlu0 %1025
  %v1027 = vmul.f32 %v1026, %v269
  %1028 = vrot.lane.b32.xlu0 %v1012, 24
  %v1029 = vpop.permute.xlu0 %1028
  %1030 = vset.pattern.permute.xlu0 48
  %1031 = vperm.xlu0 %1030, %v838
  %v1032 = vpop.permute.xlu0 %1031
  %v1034 = vmul.f32 %v1032, %v1029
  %1035 = vrot.lane.b32.xlu0 %v1015, 24
  %v1036 = vpop.permute.xlu0 %1035
  %1037 = vset.pattern.permute.xlu0 49
  %1038 = vperm.xlu0 %1037, %v838
  %v1039 = vpop.permute.xlu0 %1038
  %v1041 = vmul.f32 %v1039, %v1036
  %v1042 = vadd.f32 %v1034, %v1041
  %1043 = vrot.lane.b32.xlu0 %v1018, 24
  %v1044 = vpop.permute.xlu0 %1043
  %1045 = vset.pattern.permute.xlu0 50
  %1046 = vperm.xlu0 %1045, %v838
  %v1047 = vpop.permute.xlu0 %1046
  %v1049 = vmul.f32 %v1047, %v1044
  %v1050 = vadd.f32 %v1042, %v1049
  %1051 = vrot.lane.b32.xlu0 %v837, 24
  %v1052 = vpop.permute.xlu0 %1051
  %1053 = vset.pattern.permute.xlu0 51
  %1054 = vperm.xlu0 %1053, %v838
  %v1055 = vpop.permute.xlu0 %1054
  %v1057 = vmul.f32 %v1055, %v1052
  %v1058 = vadd.f32 %v1050, %v1057
  %1059 = vrot.lane.b32.xlu0 %v1021, 24
  %v1060 = vpop.permute.xlu0 %1059
  %1061 = vset.pattern.permute.xlu0 52
  %1062 = vperm.xlu0 %1061, %v838
  %v1063 = vpop.permute.xlu0 %1062
  %v1065 = vmul.f32 %v1063, %v1060
  %v1066 = vadd.f32 %v1058, %v1065
  %1067 = vrot.lane.b32.xlu0 %v1024, 24
  %v1068 = vpop.permute.xlu0 %1067
  %1069 = vset.pattern.permute.xlu0 53
  %1070 = vperm.xlu0 %1069, %v838
  %v1071 = vpop.permute.xlu0 %1070
  %v1073 = vmul.f32 %v1071, %v1068
  %v1074 = vadd.f32 %v1066, %v1073
  %1075 = vrot.lane.b32.xlu0 %v1027, 24
  %v1076 = vpop.permute.xlu0 %1075
  %1077 = vset.pattern.permute.xlu0 54
  %1078 = vperm.xlu0 %1077, %v838
  %v1079 = vpop.permute.xlu0 %1078
  %v1081 = vmul.f32 %v1079, %v1076
  %v1082 = vadd.f32 %v1074, %v1081
  %v1083 = vmul.f32 %v1082, %v329
  %1084 = vrot.lane.b32.xlu0 %v1012, 16
  %v1085 = vpop.permute.xlu0 %1084
  %1086 = vset.pattern.permute.xlu0 55
  %1087 = vperm.xlu0 %1086, %v838
  %v1088 = vpop.permute.xlu0 %1087
  %v1090 = vmul.f32 %v1088, %v1085
  %1091 = vrot.lane.b32.xlu0 %v1015, 16
  %v1092 = vpop.permute.xlu0 %1091
  %1093 = vset.pattern.permute.xlu0 56
  %1094 = vperm.xlu0 %1093, %v838
  %v1095 = vpop.permute.xlu0 %1094
  %v1097 = vmul.f32 %v1095, %v1092
  %v1098 = vadd.f32 %v1090, %v1097
  %1099 = vrot.lane.b32.xlu0 %v1018, 16
  %v1100 = vpop.permute.xlu0 %1099
  %1101 = vset.pattern.permute.xlu0 57
  %1102 = vperm.xlu0 %1101, %v838
  %v1103 = vpop.permute.xlu0 %1102
  %v1105 = vmul.f32 %v1103, %v1100
  %v1106 = vadd.f32 %v1098, %v1105
  %1107 = vrot.lane.b32.xlu0 %v837, 16
  %v1108 = vpop.permute.xlu0 %1107
  %1109 = vset.pattern.permute.xlu0 58
  %1110 = vperm.xlu0 %1109, %v838
  %v1111 = vpop.permute.xlu0 %1110
  %v1113 = vmul.f32 %v1111, %v1108
  %v1114 = vadd.f32 %v1106, %v1113
  %1115 = vrot.lane.b32.xlu0 %v1021, 16
  %v1116 = vpop.permute.xlu0 %1115
  %1117 = vset.pattern.permute.xlu0 59
  %1118 = vperm.xlu0 %1117, %v838
  %v1119 = vpop.permute.xlu0 %1118
  %v1121 = vmul.f32 %v1119, %v1116
  %v1122 = vadd.f32 %v1114, %v1121
  %1123 = vrot.lane.b32.xlu0 %v1024, 16
  %v1124 = vpop.permute.xlu0 %1123
  %1125 = vset.pattern.permute.xlu0 60
  %1126 = vperm.xlu0 %1125, %v838
  %v1127 = vpop.permute.xlu0 %1126
  %v1129 = vmul.f32 %v1127, %v1124
  %v1130 = vadd.f32 %v1122, %v1129
  %1131 = vrot.lane.b32.xlu0 %v1027, 16
  %v1132 = vpop.permute.xlu0 %1131
  %1133 = vset.pattern.permute.xlu0 61
  %1134 = vperm.xlu0 %1133, %v838
  %v1135 = vpop.permute.xlu0 %1134
  %v1137 = vmul.f32 %v1135, %v1132
  %v1138 = vadd.f32 %v1130, %v1137
  %v1139 = vmul.f32 %v1138, %v389
  %1140 = vrot.lane.b32.xlu0 %v1012, 8
  %v1141 = vpop.permute.xlu0 %1140
  %1142 = vset.pattern.permute.xlu0 62
  %1143 = vperm.xlu0 %1142, %v838
  %v1144 = vpop.permute.xlu0 %1143
  %v1146 = vmul.f32 %v1144, %v1141
  %1147 = vrot.lane.b32.xlu0 %v1015, 8
  %v1148 = vpop.permute.xlu0 %1147
  %1149 = vset.pattern.permute.xlu0 63
  %1150 = vperm.xlu0 %1149, %v838
  %v1151 = vpop.permute.xlu0 %1150
  %v1153 = vmul.f32 %v1151, %v1148
  %v1154 = vadd.f32 %v1146, %v1153
  %1155 = vrot.lane.b32.xlu0 %v1018, 8
  %v1156 = vpop.permute.xlu0 %1155
  %1157 = vset.pattern.permute.xlu0 64
  %1158 = vperm.xlu0 %1157, %v838
  %v1159 = vpop.permute.xlu0 %1158
  %v1161 = vmul.f32 %v1159, %v1156
  %v1162 = vadd.f32 %v1154, %v1161
  %1163 = vset.pattern.permute.xlu0 65
  %1164 = vperm.xlu0 %1163, %v838
  %v1165 = vpop.permute.xlu0 %1164
  %v1167 = vmul.f32 %v1165, %v840
  %v1168 = vadd.f32 %v1162, %v1167
  %1169 = vrot.lane.b32.xlu0 %v1021, 8
  %v1170 = vpop.permute.xlu0 %1169
  %1171 = vset.pattern.permute.xlu0 66
  %1172 = vperm.xlu0 %1171, %v838
  %v1173 = vpop.permute.xlu0 %1172
  %v1175 = vmul.f32 %v1173, %v1170
  %v1176 = vadd.f32 %v1168, %v1175
  %1177 = vrot.lane.b32.xlu0 %v1024, 8
  %v1178 = vpop.permute.xlu0 %1177
  %1179 = vset.pattern.permute.xlu0 67
  %1180 = vperm.xlu0 %1179, %v838
  %v1181 = vpop.permute.xlu0 %1180
  %v1183 = vmul.f32 %v1181, %v1178
  %v1184 = vadd.f32 %v1176, %v1183
  %1185 = vrot.lane.b32.xlu0 %v1027, 8
  %v1186 = vpop.permute.xlu0 %1185
  %1187 = vset.pattern.permute.xlu0 68
  %1188 = vperm.xlu0 %1187, %v838
  %v1189 = vpop.permute.xlu0 %1188
  %v1191 = vmul.f32 %v1189, %v1186
  %v1192 = vadd.f32 %v1184, %v1191
  %v1193 = vmul.f32 %v1192, %v26
  %1194 = vset.pattern.permute.xlu0 69
  %1195 = vperm.xlu0 %1194, %v838
  %v1196 = vpop.permute.xlu0 %1195
  %v1198 = vmul.f32 %v1196, %v1012
  %1199 = vset.pattern.permute.xlu0 70
  %1200 = vperm.xlu0 %1199, %v838
  %v1201 = vpop.permute.xlu0 %1200
  %v1203 = vmul.f32 %v1201, %v1015
  %v1204 = vadd.f32 %v1198, %v1203
  %1205 = vset.pattern.permute.xlu0 71
  %1206 = vperm.xlu0 %1205, %v838
  %v1207 = vpop.permute.xlu0 %1206
  %v1209 = vmul.f32 %v1207, %v1018
  %v1210 = vadd.f32 %v1204, %v1209
  %1211 = vset.pattern.permute.xlu0 72
  %1212 = vperm.xlu0 %1211, %v838
  %v1213 = vpop.permute.xlu0 %1212
  %v1215 = vmul.f32 %v1213, %v837
  %v1216 = vadd.f32 %v1210, %v1215
  %1217 = vset.pattern.permute.xlu0 73
  %1218 = vperm.xlu0 %1217, %v838
  %v1219 = vpop.permute.xlu0 %1218
  %v1221 = vmul.f32 %v1219, %v1021
  %v1222 = vadd.f32 %v1216, %v1221
  %1223 = vset.pattern.permute.xlu0 74
  %1224 = vperm.xlu0 %1223, %v838
  %v1225 = vpop.permute.xlu0 %1224
  %v1227 = vmul.f32 %v1225, %v1024
  %v1228 = vadd.f32 %v1222, %v1227
  %1229 = vset.pattern.permute.xlu0 75
  %1230 = vperm.xlu0 %1229, %v838
  %v1231 = vpop.permute.xlu0 %1230
  %v1233 = vmul.f32 %v1231, %v1027
  %v1234 = vadd.f32 %v1228, %v1233
  %1235 = vrot.lane.b32.xlu0 %v1012, 120
  %v1236 = vpop.permute.xlu0 %1235
  %1237 = vset.pattern.permute.xlu0 76
  %1238 = vperm.xlu0 %1237, %v838
  %v1239 = vpop.permute.xlu0 %1238
  %v1241 = vmul.f32 %v1239, %v1236
  %1242 = vrot.lane.b32.xlu0 %v1015, 120
  %v1243 = vpop.permute.xlu0 %1242
  %1244 = vset.pattern.permute.xlu0 77
  %1245 = vperm.xlu0 %1244, %v838
  %v1246 = vpop.permute.xlu0 %1245
  %v1248 = vmul.f32 %v1246, %v1243
  %v1249 = vadd.f32 %v1241, %v1248
  %1250 = vrot.lane.b32.xlu0 %v1018, 120
  %v1251 = vpop.permute.xlu0 %1250
  %1252 = vset.pattern.permute.xlu0 78
  %1253 = vperm.xlu0 %1252, %v838
  %v1254 = vpop.permute.xlu0 %1253
  %v1256 = vmul.f32 %v1254, %v1251
  %v1257 = vadd.f32 %v1249, %v1256
  %1258 = vset.pattern.permute.xlu0 79
  %1259 = vperm.xlu0 %1258, %v838
  %v1260 = vpop.permute.xlu0 %1259
  %v1262 = vmul.f32 %v1260, %v843
  %v1263 = vadd.f32 %v1257, %v1262
  %1264 = vrot.lane.b32.xlu0 %v1021, 120
  %v1265 = vpop.permute.xlu0 %1264
  %1266 = vset.pattern.permute.xlu0 80
  %1267 = vperm.xlu0 %1266, %v838
  %v1268 = vpop.permute.xlu0 %1267
  %v1270 = vmul.f32 %v1268, %v1265
  %v1271 = vadd.f32 %v1263, %v1270
  %1272 = vrot.lane.b32.xlu0 %v1024, 120
  %v1273 = vpop.permute.xlu0 %1272
  %1274 = vset.pattern.permute.xlu0 81
  %1275 = vperm.xlu0 %1274, %v838
  %v1276 = vpop.permute.xlu0 %1275
  %v1278 = vmul.f32 %v1276, %v1273
  %v1279 = vadd.f32 %v1271, %v1278
  %1280 = vrot.lane.b32.xlu0 %v1027, 120
  %v1281 = vpop.permute.xlu0 %1280
  %1282 = vset.pattern.permute.xlu0 82
  %1283 = vperm.xlu0 %1282, %v838
  %v1284 = vpop.permute.xlu0 %1283
  %v1286 = vmul.f32 %v1284, %v1281
  %v1287 = vadd.f32 %v1279, %v1286
  %v1288 = vmul.f32 %v1287, %v33
  %1289 = vrot.lane.b32.xlu0 %v1012, 112
  %v1290 = vpop.permute.xlu0 %1289
  %1291 = vset.pattern.permute.xlu0 83
  %1292 = vperm.xlu0 %1291, %v838
  %v1293 = vpop.permute.xlu0 %1292
  %v1295 = vmul.f32 %v1293, %v1290
  %1296 = vrot.lane.b32.xlu0 %v1015, 112
  %v1297 = vpop.permute.xlu0 %1296
  %1298 = vset.pattern.permute.xlu0 84
  %1299 = vperm.xlu0 %1298, %v838
  %v1300 = vpop.permute.xlu0 %1299
  %v1302 = vmul.f32 %v1300, %v1297
  %v1303 = vadd.f32 %v1295, %v1302
  %1304 = vrot.lane.b32.xlu0 %v1018, 112
  %v1305 = vpop.permute.xlu0 %1304
  %1306 = vset.pattern.permute.xlu0 85
  %1307 = vperm.xlu0 %1306, %v838
  %v1308 = vpop.permute.xlu0 %1307
  %v1310 = vmul.f32 %v1308, %v1305
  %v1311 = vadd.f32 %v1303, %v1310
  %1312 = vrot.lane.b32.xlu0 %v837, 112
  %v1313 = vpop.permute.xlu0 %1312
  %1314 = vset.pattern.permute.xlu0 86
  %1315 = vperm.xlu0 %1314, %v838
  %v1316 = vpop.permute.xlu0 %1315
  %v1318 = vmul.f32 %v1316, %v1313
  %v1319 = vadd.f32 %v1311, %v1318
  %1320 = vrot.lane.b32.xlu0 %v1021, 112
  %v1321 = vpop.permute.xlu0 %1320
  %1322 = vset.pattern.permute.xlu0 87
  %1323 = vperm.xlu0 %1322, %v838
  %v1324 = vpop.permute.xlu0 %1323
  %v1326 = vmul.f32 %v1324, %v1321
  %v1327 = vadd.f32 %v1319, %v1326
  %1328 = vrot.lane.b32.xlu0 %v1024, 112
  %v1329 = vpop.permute.xlu0 %1328
  %1330 = vset.pattern.permute.xlu0 88
  %1331 = vperm.xlu0 %1330, %v838
  %v1332 = vpop.permute.xlu0 %1331
  %v1334 = vmul.f32 %v1332, %v1329
  %v1335 = vadd.f32 %v1327, %v1334
  %1336 = vrot.lane.b32.xlu0 %v1027, 112
  %v1337 = vpop.permute.xlu0 %1336
  %1338 = vset.pattern.permute.xlu0 89
  %1339 = vperm.xlu0 %1338, %v838
  %v1340 = vpop.permute.xlu0 %1339
  %v1342 = vmul.f32 %v1340, %v1337
  %v1343 = vadd.f32 %v1335, %v1342
  %v1344 = vmul.f32 %v1343, %v602
  %1345 = vrot.lane.b32.xlu0 %v1012, 104
  %v1346 = vpop.permute.xlu0 %1345
  %1347 = vset.pattern.permute.xlu0 90
  %1348 = vperm.xlu0 %1347, %v838
  %v1349 = vpop.permute.xlu0 %1348
  %v1351 = vmul.f32 %v1349, %v1346
  %1352 = vrot.lane.b32.xlu0 %v1015, 104
  %v1353 = vpop.permute.xlu0 %1352
  %1354 = vset.pattern.permute.xlu0 91
  %1355 = vperm.xlu0 %1354, %v838
  %v1356 = vpop.permute.xlu0 %1355
  %v1358 = vmul.f32 %v1356, %v1353
  %v1359 = vadd.f32 %v1351, %v1358
  %1360 = vrot.lane.b32.xlu0 %v1018, 104
  %v1361 = vpop.permute.xlu0 %1360
  %1362 = vset.pattern.permute.xlu0 92
  %1363 = vperm.xlu0 %1362, %v838
  %v1364 = vpop.permute.xlu0 %1363
  %v1366 = vmul.f32 %v1364, %v1361
  %v1367 = vadd.f32 %v1359, %v1366
  %1368 = vrot.lane.b32.xlu0 %v837, 104
  %v1369 = vpop.permute.xlu0 %1368
  %1370 = vset.pattern.permute.xlu0 93
  %1371 = vperm.xlu0 %1370, %v838
  %v1372 = vpop.permute.xlu0 %1371
  %v1374 = vmul.f32 %v1372, %v1369
  %v1375 = vadd.f32 %v1367, %v1374
  %1376 = vrot.lane.b32.xlu0 %v1021, 104
  %v1377 = vpop.permute.xlu0 %1376
  %1378 = vset.pattern.permute.xlu0 94
  %1379 = vperm.xlu0 %1378, %v838
  %v1380 = vpop.permute.xlu0 %1379
  %v1382 = vmul.f32 %v1380, %v1377
  %v1383 = vadd.f32 %v1375, %v1382
  %1384 = vrot.lane.b32.xlu0 %v1024, 104
  %v1385 = vpop.permute.xlu0 %1384
  %1386 = vset.pattern.permute.xlu0 95
  %1387 = vperm.xlu0 %1386, %v838
  %v1388 = vpop.permute.xlu0 %1387
  %v1390 = vmul.f32 %v1388, %v1385
  %v1391 = vadd.f32 %v1383, %v1390
  %1392 = vrot.lane.b32.xlu0 %v1027, 104
  %v1393 = vpop.permute.xlu0 %1392
  %1394 = vset.pattern.permute.xlu0 96
  %1395 = vperm.xlu0 %1394, %v838
  %v1396 = vpop.permute.xlu0 %1395
  %v1398 = vmul.f32 %v1396, %v1393
  %v1399 = vadd.f32 %v1391, %v1398
  %v1400 = vmul.f32 %v1399, %v662
  %v1401 = vadd.f32 %v1083, %v1139
  %v1402 = vadd.f32 %v1193, %v1234
  %v1403 = vadd.f32 %v1288, %v1344
  %v1404 = vadd.f32 %v1401, %v1402
  %v1405 = vadd.f32 %v1403, %v1400
  %v1406 = vadd.f32 %v1404, %v1405
  %1407 = vset.pattern.permute.xlu0 123
  %1408 = vperm.xlu0 %1407, %v838
  %v1409 = vpop.permute.xlu0 %1408
  %v1411 = vadd.f32 %v1409, %v1406
  %v1412 = vmax.f32 %v1411, 0.0
  %1413 = vrot.lane.b32.xlu0 %v838, 31
  %v1414 = vpop.permute.xlu0 %1413
  %v1415 = vsel %vm678, %v1414, 0
  %1417 = vmatprep.subr.mxu0 0.0
  %1418 = vmatpush1.msra.mxu0 0.0
  %1419 = vmatprep.subr.mxu0 0.0
  %1420 = vmatpush1.msra.mxu0 0.0
  %1421 = vmatprep.subr.mxu0 0.0
  %1422 = vmatpush1.msra.mxu0 0.0
  %1423 = vmatprep.subr.mxu0 0.0
  %1424 = vmatpush1.msra.mxu0 0.0
  %1425 = vmatprep.subr.mxu0 0.0
  %1426 = vmatpush1.msra.mxu0 0.0
  %1427 = vmatprep.subr.mxu0 0.0
  %1428 = vmatpush1.msra.mxu0 0.0
  %1429 = vmatprep.subr.mxu0 0.0
  %1430 = vmatpush1.msra.mxu0 0.0
  %1431 = vmatprep.subr.mxu0 0.0
  %1432 = vmatpush1.msra.mxu0 0.0
  %1433 = vmatprep.subr.mxu0 0.0
  %1434 = vmatpush1.msra.mxu0 0.0
  %1435 = vmatprep.subr.mxu0 0.0
  %1436 = vmatpush1.msra.mxu0 0.0
  %1437 = vmatprep.subr.mxu0 0.0
  %1438 = vmatpush1.msra.mxu0 0.0
  %1439 = vmatprep.subr.mxu0 0.0
  %1440 = vmatpush1.msra.mxu0 0.0
  %1441 = vmatprep.subr.mxu0 0.0
  %1442 = vmatpush1.msra.mxu0 0.0
  %1443 = vmatprep.subr.mxu0 0.0
  %1444 = vmatpush1.msra.mxu0 0.0
  %1445 = vmatprep.subr.mxu0 0.0
  %1446 = vmatpush1.msra.mxu0 0.0
  %1447 = vmatprep.subr.mxu0 0.0
  %1448 = vmatpush1.msra.mxu0 %v1412
  %1449 = vmatprep.subr.mxu0 0.0
  %1450 = vmatpush2.msra.mxu0 0.0
  %1451 = vmatprep.subr.mxu0 0.0
  %1452 = vmatpush2.msra.mxu0 0.0
  %1453 = vmatprep.subr.mxu0 0.0
  %1454 = vmatpush2.msra.mxu0 0.0
  %1455 = vmatprep.subr.mxu0 0.0
  %1456 = vmatpush2.msra.mxu0 0.0
  %1457 = vmatprep.subr.mxu0 0.0
  %1458 = vmatpush2.msra.mxu0 0.0
  %1459 = vmatprep.subr.mxu0 0.0
  %1460 = vmatpush2.msra.mxu0 0.0
  %1461 = vmatprep.subr.mxu0 0.0
  %1462 = vmatpush2.msra.mxu0 0.0
  %1463 = vmatprep.subr.mxu0 0.0
  %1464 = vmatpush2.msra.mxu0 0.0
  %1465 = vmatprep.subr.mxu0 0.0
  %1466 = vmatpush2.msra.mxu0 0.0
  %1467 = vmatprep.subr.mxu0 0.0
  %1468 = vmatpush2.msra.mxu0 0.0
  %1469 = vmatprep.subr.mxu0 0.0
  %1470 = vmatpush2.msra.mxu0 0.0
  %1471 = vmatprep.subr.mxu0 0.0
  %1472 = vmatpush2.msra.mxu0 0.0
  %1473 = vmatprep.subr.mxu0 0.0
  %1474 = vmatpush2.msra.mxu0 0.0
  %1475 = vmatprep.subr.mxu0 0.0
  %1476 = vmatpush2.msra.mxu0 0.0
  %1477 = vmatprep.subr.mxu0 0.0
  %1478 = vmatpush2.msra.mxu0 0.0
  %1479 = vmatprep.subr.mxu0 0.0
  %1480 = vmatpush2.msra.mxu0 0.0
  %1481 = vmatprep.mubr.f32.mxu0 0.0
  %1482 = vmatmul.mubr.f32.gmra.mxu0 %v1415
  %v1483 = vpop.f32.mrf.mxu0
  %v1484 = vadd.f32 0.0, %v1483
  %v1485 = vpop.f32.mrf.mxu0
  %1486 = vdwg.mxu0
  %1487 = vset.pattern.permute.xlu0 124
  %1488 = vperm.xlu0 %1487, %v838
  %v1489 = vpop.permute.xlu0 %1488
  %v1491 = vadd.f32 %v1489, %v1484
  %v1492 = vmax.f32 %v1491, 0.0
  %1493 = vrot.lane.b32.xlu0 %v838, 23
  %v1494 = vpop.permute.xlu0 %1493
  %v1495 = vsel %vm759, %v1494, 0
  %1497 = vmatprep.subr.mxu0 0.0
  %1498 = vmatpush1.msra.mxu0 0.0
  %1499 = vmatprep.subr.mxu0 0.0
  %1500 = vmatpush1.msra.mxu0 0.0
  %1501 = vmatprep.subr.mxu0 0.0
  %1502 = vmatpush1.msra.mxu0 0.0
  %1503 = vmatprep.subr.mxu0 0.0
  %1504 = vmatpush1.msra.mxu0 0.0
  %1505 = vmatprep.subr.mxu0 0.0
  %1506 = vmatpush1.msra.mxu0 0.0
  %1507 = vmatprep.subr.mxu0 0.0
  %1508 = vmatpush1.msra.mxu0 0.0
  %1509 = vmatprep.subr.mxu0 0.0
  %1510 = vmatpush1.msra.mxu0 0.0
  %1511 = vmatprep.subr.mxu0 0.0
  %1512 = vmatpush1.msra.mxu0 0.0
  %1513 = vmatprep.subr.mxu0 0.0
  %1514 = vmatpush1.msra.mxu0 0.0
  %1515 = vmatprep.subr.mxu0 0.0
  %1516 = vmatpush1.msra.mxu0 0.0
  %1517 = vmatprep.subr.mxu0 0.0
  %1518 = vmatpush1.msra.mxu0 0.0
  %1519 = vmatprep.subr.mxu0 0.0
  %1520 = vmatpush1.msra.mxu0 0.0
  %1521 = vmatprep.subr.mxu0 0.0
  %1522 = vmatpush1.msra.mxu0 0.0
  %1523 = vmatprep.subr.mxu0 0.0
  %1524 = vmatpush1.msra.mxu0 0.0
  %1525 = vmatprep.subr.mxu0 0.0
  %1526 = vmatpush1.msra.mxu0 %v1492
  %1527 = vmatprep.subr.mxu0 0.0
  %1528 = vmatpush1.msra.mxu0 %v1009
  %1529 = vmatprep.subr.mxu0 0.0
  %1530 = vmatpush2.msra.mxu0 0.0
  %1531 = vmatprep.subr.mxu0 0.0
  %1532 = vmatpush2.msra.mxu0 0.0
  %1533 = vmatprep.subr.mxu0 0.0
  %1534 = vmatpush2.msra.mxu0 0.0
  %1535 = vmatprep.subr.mxu0 0.0
  %1536 = vmatpush2.msra.mxu0 0.0
  %1537 = vmatprep.subr.mxu0 0.0
  %1538 = vmatpush2.msra.mxu0 0.0
  %1539 = vmatprep.subr.mxu0 0.0
  %1540 = vmatpush2.msra.mxu0 0.0
  %1541 = vmatprep.subr.mxu0 0.0
  %1542 = vmatpush2.msra.mxu0 0.0
  %1543 = vmatprep.subr.mxu0 0.0
  %1544 = vmatpush2.msra.mxu0 0.0
  %1545 = vmatprep.subr.mxu0 0.0
  %1546 = vmatpush2.msra.mxu0 0.0
  %1547 = vmatprep.subr.mxu0 0.0
  %1548 = vmatpush2.msra.mxu0 0.0
  %1549 = vmatprep.subr.mxu0 0.0
  %1550 = vmatpush2.msra.mxu0 0.0
  %1551 = vmatprep.subr.mxu0 0.0
  %1552 = vmatpush2.msra.mxu0 0.0
  %1553 = vmatprep.subr.mxu0 0.0
  %1554 = vmatpush2.msra.mxu0 0.0
  %1555 = vmatprep.subr.mxu0 0.0
  %1556 = vmatpush2.msra.mxu0 0.0
  %1557 = vmatprep.subr.mxu0 0.0
  %1558 = vmatpush2.msra.mxu0 0.0
  %1559 = vmatprep.subr.mxu0 0.0
  %1560 = vmatpush2.msra.mxu0 0.0
  %1561 = vmatprep.mubr.f32.mxu0 0.0
  %1562 = vmatmul.mubr.f32.gmra.mxu0 %v1495
  %v1563 = vpop.f32.mrf.mxu0
  %v1564 = vadd.f32 0.0, %v1563
  %v1565 = vpop.f32.mrf.mxu0
  %1566 = vdwg.mxu0
  %1567 = vset.pattern.permute.xlu0 125
  %1568 = vperm.xlu0 %1567, %v838
  %v1569 = vpop.permute.xlu0 %1568
  %v1571 = vadd.f32 %v1569, %v1564
  %v1572 = vmax.f32 %v1571, 0.0
  %1573 = vst [vmem:[%s4] sm:$0xff] %v1572
  // Predicated region
  $region18: #{down_pallas.1} parent=0 // pred_check
    _
  $region19: #{down_pallas.1} parent=0 // pred_check_branch
    %1575 = sbr.rel (0) target = $region21
  $region20: #{down_pallas.1} parent=0 // pred_region
    _
  $region21: #{down_pallas.1} parent=0 // pred_fallthru
    _
  // Predicated region
  $region22: #{down_pallas.1} parent=0 // pred_check
    _
  $region23: #{down_pallas.1} parent=0 // pred_check_branch
    %1577 = sbr.rel (0) target = $region25
  $region24: #{down_pallas.1} parent=0 // pred_region
    _
  $region25: #{down_pallas.1} parent=0 // pred_fallthru
    _

</llo_original>
